<compile_context>
chip_gen: v6e
topology: v6e:2x2x1
jax: 0.10.0
libtpu: 0.0.40
codegen_flags: <defaults>
</compile_context>

<pallas_src>
import functools
import math

import jax
import jax.numpy as jnp
from jax.experimental import pallas as pl
from jax.experimental.pallas import tpu as pltpu


def transformer_block_kernel(x_ref, wqkv_ref, wo_ref, win_ref, bin_ref,
                             wout_ref, bout_ref, out_ref,
                             *, num_heads, d_head, attn_coeff, act_type):
    f32 = jnp.float32
    BB, P, D = x_ref.shape
    H, dh = num_heads, d_head
    rows = BB * P
    A = H * BB
    cd = wqkv_ref.dtype                                    # MXU-input dtype (bf16 default)
    approx_recip = jnp.dtype(cd) != jnp.dtype(jnp.float32)  # exact recip only for f32 parity

    x = x_ref[...].reshape(rows, D)                        # (rows, D) f32, rows = b*P + p
    xc = x.astype(cd)

    # --- Head-batched fused QKV projection ----------------------------------
    # wqkv_ref is (H, D, 3*dh) with per-head columns [q | k | v]; the 1/sqrt(dh)
    # score scale is pre-folded into the q columns by the wrapper.  Broadcasting x
    # along the head axis makes the head split a leading batch axis of a single
    # batched MXU contraction -> no per-head lane slicing / jnp.stack in-kernel.
    xh = jnp.broadcast_to(xc[None], (H, rows, D))
    qkv_h = jnp.einsum('hrd,hde->hre', xh, wqkv_ref[...],
                       preferred_element_type=f32)          # (H, rows, 3*dh) f32
    qkv_a = qkv_h.reshape(A, P, 3 * dh)                     # leading-dim reshape (P % 8 == 0)
    q = qkv_a[:, :, 0 * dh:1 * dh]                          # (A, P, dh), already scaled
    k = qkv_a[:, :, 1 * dh:2 * dh]
    v = qkv_a[:, :, 2 * dh:3 * dh]

    # --- Attention with deferred-normalization softmax ----------------------
    s = jnp.einsum('aqe,ake->aqk', q.astype(cd), k.astype(cd),
                   preferred_element_type=f32)              # (A, P, P) f32
    m = jnp.max(s, axis=-1, keepdims=True)
    e = jnp.exp(s - m)
    l = jnp.sum(e, axis=-1, keepdims=True)                  # (A, P, 1)
    u = jnp.einsum('aqk,ake->aqe', e.astype(cd), v.astype(cd),
                   preferred_element_type=f32)              # (A, P, dh)
    v_sum = jnp.sum(v, axis=1, keepdims=True)               # (A, 1, dh)

    # attn = c*softmax + (1-c)  =>  z = (c / l) * (e @ v) + (1 - c) * sum_p v
    z = (attn_coeff * pl.reciprocal(l, approx=approx_recip)) * u \
        + (1.0 - attn_coeff) * v_sum                        # (A, P, dh) f32

    # --- Output projection ---------------------------------------------------
    # Accumulate per-head (rows, dh) @ (dh, D) matmuls into one (rows, D) f32
    # buffer instead of materializing (H, rows, D) + a VPU head reduction.
    z_r = z.reshape(H, rows, dh).astype(cd)                 # leading-dim reshape only
    wo = wo_ref[...]                                        # (H, dh, D)
    attn_out = jnp.zeros((rows, D), f32)
    for h in range(H):                                      # static unroll; H is small
        attn_out = attn_out + jnp.dot(z_r[h], wo[h], preferred_element_type=f32)

    resid_mid = x + attn_out                                # f32 residual

    # --- MLP -----------------------------------------------------------------
    pre = jnp.dot(resid_mid.astype(cd), win_ref[...],
                  preferred_element_type=f32) + bin_ref[...]       # (rows, d_mlp) f32
    if act_type == 'ReLU':
        post = jnp.maximum(pre, 0.0)
    elif act_type == 'GeLU':
        post = jax.nn.gelu(pre, approximate=False)          # matches F.gelu default (erf)
    else:  # 'Tanh'
        post = jnp.tanh(pre)
    mlp_out = jnp.dot(post.astype(cd), wout_ref[...],
                      preferred_element_type=f32) + bout_ref[...]  # (rows, D) f32

    out_ref[...] = (resid_mid + mlp_out).reshape(BB, P, D)


def transformer_block(x, params, *, num_heads, d_head, attn_coeff, act_type,
                      block_b=None, compute_dtype=jnp.bfloat16):
    assert act_type in ['ReLU', 'GeLU', 'Tanh']
    B, P, D = x.shape
    H, dh = num_heads, d_head
    d_mlp = params['W_in'].shape[0]
    assert P % 8 == 0, "seq length must be a multiple of 8 (f32 sublane tile)"

    # --- one-time wrapper-side layout / dtype work ---------------------------
    inv_sqrt_dh = 1.0 / math.sqrt(dh)
    wq_t = jnp.transpose(params['W_Q'], (0, 2, 1)) * inv_sqrt_dh   # (H, D, dh), scale folded
    wk_t = jnp.transpose(params['W_K'], (0, 2, 1))                 # (H, D, dh)
    wv_t = jnp.transpose(params['W_V'], (0, 2, 1))                 # (H, D, dh)
    w_qkv = jnp.concatenate([wq_t, wk_t, wv_t], axis=-1)           # (H, D, 3*dh)
    w_o = params['W_O'].T.reshape(H, dh, D)                        # (H, dh, D)
    w_in = params['W_in'].T                                        # (D, d_mlp)
    w_out = params['W_out'].T                                      # (d_mlp, D)
    b_in = params['b_in'].reshape(1, d_mlp).astype(jnp.float32)
    b_out = params['b_out'].reshape(1, D).astype(jnp.float32)

    w_qkv = w_qkv.astype(compute_dtype)
    w_o = w_o.astype(compute_dtype)
    w_in = w_in.astype(compute_dtype)
    w_out = w_out.astype(compute_dtype)

    if block_b is None:
        # rows = block_b*P ~ 256 keeps the MXU M reasonably tall, while the grid
        # length B // block_b is kept >= 2 so v7x's second TensorCore gets work.
        target = max(1, 256 // max(P, 1))
        max_bb = B if B < 2 else max(1, B // 2)
        cap = max(1, min(target, max_bb))
        block_b = 1
        for cand in range(1, B + 1):
            if B % cand == 0 and cand <= cap:
                block_b = cand
    assert B % block_b == 0, "block_b must divide the batch size"

    kernel = functools.partial(
        transformer_block_kernel,
        num_heads=H, d_head=dh, attn_coeff=attn_coeff, act_type=act_type)

    def const_spec(shape):
        n = len(shape)
        return pl.BlockSpec(shape, lambda b: (0,) * n)

    # --- cost estimate + explicit VMEM budget --------------------------------
    rows_total = B * P
    flops = (2 * rows_total * D * 3 * H * dh          # QKV projection
             + 2 * B * H * P * P * dh * 2             # scores + PV
             + 2 * rows_total * H * dh * D            # output projection
             + 2 * rows_total * D * d_mlp * 2)        # MLP in + out
    transcendentals = B * H * P * P                   # softmax exp
    if act_type != 'ReLU':
        transcendentals += rows_total * d_mlp
    w_bytes = sum(int(a.size) * a.dtype.itemsize
                  for a in (w_qkv, w_o, w_in, b_in, w_out, b_out))
    bytes_accessed = int(w_bytes + 2 * rows_total * D * 4)

    cs = jnp.dtype(compute_dtype).itemsize
    blk_rows = block_b * P
    a_blk = H * block_b
    vmem_est = (2 * w_bytes                           # constant-index weights, double-buffered
                + 2 * 2 * blk_rows * D * 4            # x / out blocks (double-buffered, f32)
                + H * blk_rows * D * cs               # broadcast lhs for QKV
                + H * blk_rows * 3 * dh * 4           # qkv projection result
                + 3 * a_blk * P * P * 4               # scores / exp (+ slack)
                + 2 * blk_rows * d_mlp * 4            # MLP pre / post
                + 8 * blk_rows * D * 4)               # misc f32 temporaries
    vmem_limit = int(min(max(2 * vmem_est, 32 * 2 ** 20), 64 * 2 ** 20))

    return pl.pallas_call(
        kernel,
        out_shape=jax.ShapeDtypeStruct((B, P, D), jnp.float32),
        grid=(B // block_b,),
        in_specs=[
            pl.BlockSpec((block_b, P, D), lambda b: (b, 0, 0)),   # x
            const_spec((H, D, 3 * dh)),                           # fused per-head QKV weight
            const_spec((H, dh, D)),                               # W_O (head-batched)
            const_spec((D, d_mlp)),                               # W_in
            const_spec((1, d_mlp)),                               # b_in
            const_spec((d_mlp, D)),                               # W_out
            const_spec((1, D)),                                   # b_out
        ],
        out_specs=pl.BlockSpec((block_b, P, D), lambda b: (b, 0, 0)),
        compiler_params=pltpu.CompilerParams(
            dimension_semantics=("parallel",),
            vmem_limit_bytes=vmem_limit),
        cost_estimate=pl.CostEstimate(
            flops=int(flops), transcendentals=int(transcendentals),
            bytes_accessed=bytes_accessed),
    )(x, w_qkv, w_o, w_in, b_in, w_out, b_out)


def transformer_block_ref(x, params, *, num_heads, d_head, attn_coeff, act_type):
    """Pure-JAX reference mirroring the PyTorch einsums exactly (f32)."""
    W_K, W_Q, W_V, W_O = params['W_K'], params['W_Q'], params['W_V'], params['W_O']
    W_in, b_in, W_out, b_out = params['W_in'], params['b_in'], params['W_out'], params['b_out']

    k = jnp.einsum('ihd,bpd->biph', W_K, x)
    q = jnp.einsum('ihd,bpd->biph', W_Q, x)
    v = jnp.einsum('ihd,bpd->biph', W_V, x)
    scores = jnp.einsum('biph,biqh->biqp', k, q) / math.sqrt(d_head)
    attn = jax.nn.softmax(scores, axis=-1) * attn_coeff + (1.0 - attn_coeff)
    z = jnp.einsum('biph,biqp->biqh', v, attn)
    B, I, Q, Hd = z.shape
    z_flat = jnp.transpose(z, (0, 2, 1, 3)).reshape(B, Q, I * Hd)  # 'b i q h -> b q (i h)'
    attn_out = jnp.einsum('df,bqf->bqd', W_O, z_flat)
    x = x + attn_out

    pre = jnp.einsum('md,bpd->bpm', W_in, x) + b_in
    if act_type == 'ReLU':
        post = jnp.maximum(pre, 0.0)
    elif act_type == 'GeLU':
        post = jax.nn.gelu(pre, approximate=False)
    else:
        post = jnp.tanh(pre)
    mlp_out = jnp.einsum('dm,bpm->bpd', W_out, post) + b_out
    return x + mlp_out


if __name__ == "__main__":
    # Small shapes consistent with the module.
    B, P = 2, 8           # batch, seq (n_ctx)
    d_model, d_head, num_heads = 32, 8, 4
    d_mlp = 4 * d_model
    act_type = 'ReLU'
    attn_coeff = 0.7

    key = jax.random.PRNGKey(0)
    ks = jax.random.split(key, 7)
    params = {
        'W_K': jax.random.normal(ks[0], (num_heads, d_head, d_model), jnp.float32) / math.sqrt(d_model),
        'W_Q': jax.random.normal(ks[1], (num_heads, d_head, d_model), jnp.float32) / math.sqrt(d_model),
        'W_V': jax.random.normal(ks[2], (num_heads, d_head, d_model), jnp.float32) / math.sqrt(d_model),
        'W_O': jax.random.normal(ks[3], (d_model, d_head * num_heads), jnp.float32) / math.sqrt(d_model),
        'W_in': jax.random.normal(ks[4], (d_mlp, d_model), jnp.float32) / math.sqrt(d_mlp),
        'b_in': jnp.zeros((d_mlp,), jnp.float32),
        'W_out': jax.random.normal(ks[5], (d_model, d_mlp), jnp.float32) / math.sqrt(d_model),
        'b_out': jnp.zeros((d_model,), jnp.float32),
    }
    x = jax.random.normal(ks[6], (B, P, d_model), jnp.float32)

    ref = transformer_block_ref(x, params, num_heads=num_heads, d_head=d_head,
                                attn_coeff=attn_coeff, act_type=act_type)

    # 1) f32 parity mode: must match the PyTorch/JAX reference to 1e-4.
    out_f32 = transformer_block(x, params, num_heads=num_heads, d_head=d_head,
                                attn_coeff=attn_coeff, act_type=act_type,
                                compute_dtype=jnp.float32)
    out_f32 = jax.block_until_ready(out_f32)
    assert out_f32.shape == (B, P, d_model)
    assert jnp.allclose(out_f32, ref, atol=1e-4, rtol=1e-4), "f32 parity mismatch vs reference"

    # 2) performance default: bf16 MXU inputs, f32 accumulation (looser tolerance).
    out_bf16 = transformer_block(x, params, num_heads=num_heads, d_head=d_head,
                                 attn_coeff=attn_coeff, act_type=act_type)
    out_bf16 = jax.block_until_ready(out_bf16)
    assert out_bf16.shape == (B, P, d_model)
    assert float(jnp.max(jnp.abs(out_bf16 - ref))) < 0.25, "bf16 path diverged from reference"

    print("KERNEL_OK")
</pallas_src>

<mosaic_0001>
module attributes {stable_mosaic.version = 11 : i64} {
  func.func @transformer_block_kernel(%arg0: i32, %arg1: memref<1x8x32xf32, #tpu.memory_space<vmem>>, %arg2: memref<4x32x24xf32, #tpu.memory_space<vmem>>, %arg3: memref<4x8x32xf32, #tpu.memory_space<vmem>>, %arg4: memref<32x128xf32, #tpu.memory_space<vmem>>, %arg5: memref<1x128xf32, #tpu.memory_space<vmem>>, %arg6: memref<128x32xf32, #tpu.memory_space<vmem>>, %arg7: memref<1x32xf32, #tpu.memory_space<vmem>>, %arg8: memref<1x8x32xf32, #tpu.memory_space<vmem>>) attributes {dimension_semantics = [#tpu.dimension_semantics<parallel>], iteration_bounds = array<i64: 2>, scalar_prefetch = 0 : i64, scratch_operands = 0 : i64, tpu.core_type = #tpu.core_type<tc>, window_params = [{transform_indices = @transform_0, window_bounds = array<i64: 1, 8, 32>}, {pipeline_mode = #tpu.pipeline_mode<synchronous>, transform_indices = @transform_1, window_bounds = array<i64: 4, 32, 24>}, {pipeline_mode = #tpu.pipeline_mode<synchronous>, transform_indices = @transform_2, window_bounds = array<i64: 4, 8, 32>}, {pipeline_mode = #tpu.pipeline_mode<synchronous>, transform_indices = @transform_3, window_bounds = array<i64: 32, 128>}, {pipeline_mode = #tpu.pipeline_mode<synchronous>, transform_indices = @transform_4, window_bounds = array<i64: 1, 128>}, {pipeline_mode = #tpu.pipeline_mode<synchronous>, transform_indices = @transform_5, window_bounds = array<i64: 128, 32>}, {pipeline_mode = #tpu.pipeline_mode<synchronous>, transform_indices = @transform_6, window_bounds = array<i64: 1, 32>}, {transform_indices = @transform_7, window_bounds = array<i64: 1, 8, 32>}]} {
    %c0 = arith.constant 0 : index
    %c0_0 = arith.constant 0 : index
    %c0_1 = arith.constant 0 : index
    %0 = vector.load %arg1[%c0, %c0_0, %c0_1] : memref<1x8x32xf32, #tpu.memory_space<vmem>>, vector<1x8x32xf32>
    %1 = vector.shape_cast %0 : vector<1x8x32xf32> to vector<8x32xf32>
    %2 = vector.shape_cast %1 : vector<8x32xf32> to vector<1x8x32xf32>
    %3 = vector.shape_cast %2 : vector<1x8x32xf32> to vector<1x8x32xf32>
    %4 = vector.broadcast %3 : vector<1x8x32xf32> to vector<4x8x32xf32>
    %c0_2 = arith.constant 0 : index
    %c0_3 = arith.constant 0 : index
    %c0_4 = arith.constant 0 : index
    %5 = vector.load %arg2[%c0_2, %c0_3, %c0_4] : memref<4x32x24xf32, #tpu.memory_space<vmem>>, vector<4x32x24xf32>
    "tpu.trace_start"() <{level = 10 : i32, message = "hrd,hde->hre"}> : () -> ()
    %cst = arith.constant dense<0.000000e+00> : vector<4x8x24xf32>
    %6 = tpu.matmul %4, %5, %cst {dimension_numbers = #tpu.dot_dimension_numbers<[2], [1], [1], [2], [0, 0, 0, 1, 1, 2], [0], [0]>} : vector<4x8x32xf32>, vector<4x32x24xf32>, vector<4x8x24xf32> -> vector<4x8x24xf32>
    "tpu.trace_stop"() : () -> ()
    %7 = vector.extract_strided_slice %6 {offsets = [0, 0, 0], sizes = [4, 8, 8], strides = [1, 1, 1]} : vector<4x8x24xf32> to vector<4x8x8xf32>
    %8 = vector.extract_strided_slice %6 {offsets = [0, 0, 8], sizes = [4, 8, 8], strides = [1, 1, 1]} : vector<4x8x24xf32> to vector<4x8x8xf32>
    %9 = vector.extract_strided_slice %6 {offsets = [0, 0, 16], sizes = [4, 8, 8], strides = [1, 1, 1]} : vector<4x8x24xf32> to vector<4x8x8xf32>
    "tpu.trace_start"() <{level = 10 : i32, message = "aqe,ake->aqk"}> : () -> ()
    %cst_5 = arith.constant dense<0.000000e+00> : vector<4x8x8xf32>
    %10 = tpu.matmul %7, %8, %cst_5 {dimension_numbers = #tpu.dot_dimension_numbers<[2], [2], [1], [1], [0, 0, 0, 1, 1, 1], [0], [0]>} : vector<4x8x8xf32>, vector<4x8x8xf32>, vector<4x8x8xf32> -> vector<4x8x8xf32>
    "tpu.trace_stop"() : () -> ()
    %cst_6 = arith.constant dense<0xFF800000> : vector<4x8xf32>
    %11 = vector.multi_reduction <maximumf>, %10, %cst_6 [2] : vector<4x8x8xf32> to vector<4x8xf32>
    %12 = vector.shape_cast %11 : vector<4x8xf32> to vector<4x8x1xf32>
    %13 = vector.broadcast %12 : vector<4x8x1xf32> to vector<4x8x8xf32>
    %14 = arith.subf %10, %13 : vector<4x8x8xf32>
    %15 = math.exp %14 : vector<4x8x8xf32>
    %cst_7 = arith.constant dense<0.000000e+00> : vector<4x8xf32>
    %16 = vector.multi_reduction <add>, %15, %cst_7 [2] : vector<4x8x8xf32> to vector<4x8xf32>
    %17 = vector.shape_cast %16 : vector<4x8xf32> to vector<4x8x1xf32>
    "tpu.trace_start"() <{level = 10 : i32, message = "aqk,ake->aqe"}> : () -> ()
    %cst_8 = arith.constant dense<0.000000e+00> : vector<4x8x8xf32>
    %18 = tpu.matmul %15, %9, %cst_8 {dimension_numbers = #tpu.dot_dimension_numbers<[2], [1], [1], [2], [0, 0, 0, 1, 1, 2], [0], [0]>} : vector<4x8x8xf32>, vector<4x8x8xf32>, vector<4x8x8xf32> -> vector<4x8x8xf32>
    "tpu.trace_stop"() : () -> ()
    %cst_9 = arith.constant dense<0.000000e+00> : vector<4x8xf32>
    %19 = vector.multi_reduction <add>, %9, %cst_9 [1] : vector<4x8x8xf32> to vector<4x8xf32>
    %20 = vector.shape_cast %19 : vector<4x8xf32> to vector<4x1x8xf32>
    %21 = tpu.reciprocal %17 : vector<4x8x1xf32> -> vector<4x8x1xf32>
    %cst_10 = arith.constant 0.699999988 : f32
    %22 = vector.broadcast %cst_10 : f32 to vector<4x8x1xf32>
    %23 = arith.mulf %22, %21 : vector<4x8x1xf32>
    %24 = vector.broadcast %23 : vector<4x8x1xf32> to vector<4x8x8xf32>
    %25 = arith.mulf %24, %18 : vector<4x8x8xf32>
    %cst_11 = arith.constant 3.000000e-01 : f32
    %26 = vector.broadcast %cst_11 : f32 to vector<4x1x8xf32>
    %27 = arith.mulf %26, %20 : vector<4x1x8xf32>
    %28 = vector.broadcast %27 : vector<4x1x8xf32> to vector<4x8x8xf32>
    %29 = arith.addf %25, %28 : vector<4x8x8xf32>
    %c0_12 = arith.constant 0 : index
    %c0_13 = arith.constant 0 : index
    %c0_14 = arith.constant 0 : index
    %30 = vector.load %arg3[%c0_12, %c0_13, %c0_14] : memref<4x8x32xf32, #tpu.memory_space<vmem>>, vector<4x8x32xf32>
    %cst_15 = arith.constant 0.000000e+00 : f32
    %31 = vector.broadcast %cst_15 : f32 to vector<8x32xf32>
    %32 = vector.extract_strided_slice %29 {offsets = [0, 0, 0], sizes = [1, 8, 8], strides = [1, 1, 1]} : vector<4x8x8xf32> to vector<1x8x8xf32>
    %33 = vector.shape_cast %32 : vector<1x8x8xf32> to vector<8x8xf32>
    %34 = vector.extract_strided_slice %30 {offsets = [0, 0, 0], sizes = [1, 8, 32], strides = [1, 1, 1]} : vector<4x8x32xf32> to vector<1x8x32xf32>
    %35 = vector.shape_cast %34 : vector<1x8x32xf32> to vector<8x32xf32>
    %cst_16 = arith.constant dense<0.000000e+00> : vector<8x32xf32>
    %36 = tpu.matmul %33, %35, %cst_16 {dimension_numbers = #tpu.dot_dimension_numbers<[1], [0], [0], [1], [0, 0, 1, 1], [], []>} : vector<8x8xf32>, vector<8x32xf32>, vector<8x32xf32> -> vector<8x32xf32>
    %37 = arith.addf %31, %36 : vector<8x32xf32>
    %38 = vector.extract_strided_slice %29 {offsets = [1, 0, 0], sizes = [1, 8, 8], strides = [1, 1, 1]} : vector<4x8x8xf32> to vector<1x8x8xf32>
    %39 = vector.shape_cast %38 : vector<1x8x8xf32> to vector<8x8xf32>
    %40 = vector.extract_strided_slice %30 {offsets = [1, 0, 0], sizes = [1, 8, 32], strides = [1, 1, 1]} : vector<4x8x32xf32> to vector<1x8x32xf32>
    %41 = vector.shape_cast %40 : vector<1x8x32xf32> to vector<8x32xf32>
    %cst_17 = arith.constant dense<0.000000e+00> : vector<8x32xf32>
    %42 = tpu.matmul %39, %41, %cst_17 {dimension_numbers = #tpu.dot_dimension_numbers<[1], [0], [0], [1], [0, 0, 1, 1], [], []>} : vector<8x8xf32>, vector<8x32xf32>, vector<8x32xf32> -> vector<8x32xf32>
    %43 = arith.addf %37, %42 : vector<8x32xf32>
    %44 = vector.extract_strided_slice %29 {offsets = [2, 0, 0], sizes = [1, 8, 8], strides = [1, 1, 1]} : vector<4x8x8xf32> to vector<1x8x8xf32>
    %45 = vector.shape_cast %44 : vector<1x8x8xf32> to vector<8x8xf32>
    %46 = vector.extract_strided_slice %30 {offsets = [2, 0, 0], sizes = [1, 8, 32], strides = [1, 1, 1]} : vector<4x8x32xf32> to vector<1x8x32xf32>
    %47 = vector.shape_cast %46 : vector<1x8x32xf32> to vector<8x32xf32>
    %cst_18 = arith.constant dense<0.000000e+00> : vector<8x32xf32>
    %48 = tpu.matmul %45, %47, %cst_18 {dimension_numbers = #tpu.dot_dimension_numbers<[1], [0], [0], [1], [0, 0, 1, 1], [], []>} : vector<8x8xf32>, vector<8x32xf32>, vector<8x32xf32> -> vector<8x32xf32>
    %49 = arith.addf %43, %48 : vector<8x32xf32>
    %50 = vector.extract_strided_slice %29 {offsets = [3, 0, 0], sizes = [1, 8, 8], strides = [1, 1, 1]} : vector<4x8x8xf32> to vector<1x8x8xf32>
    %51 = vector.shape_cast %50 : vector<1x8x8xf32> to vector<8x8xf32>
    %52 = vector.extract_strided_slice %30 {offsets = [3, 0, 0], sizes = [1, 8, 32], strides = [1, 1, 1]} : vector<4x8x32xf32> to vector<1x8x32xf32>
    %53 = vector.shape_cast %52 : vector<1x8x32xf32> to vector<8x32xf32>
    %cst_19 = arith.constant dense<0.000000e+00> : vector<8x32xf32>
    %54 = tpu.matmul %51, %53, %cst_19 {dimension_numbers = #tpu.dot_dimension_numbers<[1], [0], [0], [1], [0, 0, 1, 1], [], []>} : vector<8x8xf32>, vector<8x32xf32>, vector<8x32xf32> -> vector<8x32xf32>
    %55 = arith.addf %49, %54 : vector<8x32xf32>
    %56 = arith.addf %1, %55 : vector<8x32xf32>
    %c0_20 = arith.constant 0 : index
    %c0_21 = arith.constant 0 : index
    %57 = vector.load %arg4[%c0_20, %c0_21] : memref<32x128xf32, #tpu.memory_space<vmem>>, vector<32x128xf32>
    %cst_22 = arith.constant dense<0.000000e+00> : vector<8x128xf32>
    %58 = tpu.matmul %56, %57, %cst_22 {dimension_numbers = #tpu.dot_dimension_numbers<[1], [0], [0], [1], [0, 0, 1, 1], [], []>} : vector<8x32xf32>, vector<32x128xf32>, vector<8x128xf32> -> vector<8x128xf32>
    %c0_23 = arith.constant 0 : index
    %c0_24 = arith.constant 0 : index
    %59 = vector.load %arg5[%c0_23, %c0_24] : memref<1x128xf32, #tpu.memory_space<vmem>>, vector<1x128xf32>
    %60 = vector.broadcast %59 : vector<1x128xf32> to vector<8x128xf32>
    %61 = arith.addf %58, %60 : vector<8x128xf32>
    %cst_25 = arith.constant 0.000000e+00 : f32
    %62 = vector.broadcast %cst_25 : f32 to vector<8x128xf32>
    %63 = arith.maximumf %61, %62 : vector<8x128xf32>
    %c0_26 = arith.constant 0 : index
    %c0_27 = arith.constant 0 : index
    %64 = vector.load %arg6[%c0_26, %c0_27] : memref<128x32xf32, #tpu.memory_space<vmem>>, vector<128x32xf32>
    %cst_28 = arith.constant dense<0.000000e+00> : vector<8x32xf32>
    %65 = tpu.matmul %63, %64, %cst_28 {dimension_numbers = #tpu.dot_dimension_numbers<[1], [0], [0], [1], [0, 0, 1, 1], [], []>} : vector<8x128xf32>, vector<128x32xf32>, vector<8x32xf32> -> vector<8x32xf32>
    %c0_29 = arith.constant 0 : index
    %c0_30 = arith.constant 0 : index
    %66 = vector.load %arg7[%c0_29, %c0_30] : memref<1x32xf32, #tpu.memory_space<vmem>>, vector<1x32xf32>
    %67 = vector.broadcast %66 : vector<1x32xf32> to vector<8x32xf32>
    %68 = arith.addf %65, %67 : vector<8x32xf32>
    %69 = arith.addf %56, %68 : vector<8x32xf32>
    %70 = vector.shape_cast %69 : vector<8x32xf32> to vector<1x8x32xf32>
    %c0_31 = arith.constant 0 : index
    %c0_32 = arith.constant 0 : index
    %c0_33 = arith.constant 0 : index
    %71 = vector.load %arg8[%c0_31, %c0_32, %c0_33] : memref<1x8x32xf32, #tpu.memory_space<vmem>>, vector<1x8x32xf32>
    tpu.vector_store %arg8[%c0_31, %c0_32, %c0_33], %70 {strides = array<i32>} : memref<1x8x32xf32, #tpu.memory_space<vmem>>, vector<1x8x32xf32>,
    return
  }
  func.func @transform_0(%arg0: i32) -> (i32, i32, i32) {
    %c0_i32 = arith.constant 0 : i32
    %c0_i32_0 = arith.constant 0 : i32
    %c0_i32_1 = arith.constant 0 : i32
    return %arg0, %c0_i32, %c0_i32_0 : i32, i32, i32
  }
  func.func @transform_1(%arg0: i32) -> (i32, i32, i32) {
    %c0_i32 = arith.constant 0 : i32
    %c0_i32_0 = arith.constant 0 : i32
    %c0_i32_1 = arith.constant 0 : i32
    %c0_i32_2 = arith.constant 0 : i32
    return %c0_i32, %c0_i32_0, %c0_i32_1 : i32, i32, i32
  }
  func.func @transform_2(%arg0: i32) -> (i32, i32, i32) {
    %c0_i32 = arith.constant 0 : i32
    %c0_i32_0 = arith.constant 0 : i32
    %c0_i32_1 = arith.constant 0 : i32
    %c0_i32_2 = arith.constant 0 : i32
    return %c0_i32, %c0_i32_0, %c0_i32_1 : i32, i32, i32
  }
  func.func @transform_3(%arg0: i32) -> (i32, i32) {
    %c0_i32 = arith.constant 0 : i32
    %c0_i32_0 = arith.constant 0 : i32
    %c0_i32_1 = arith.constant 0 : i32
    return %c0_i32, %c0_i32_0 : i32, i32
  }
  func.func @transform_4(%arg0: i32) -> (i32, i32) {
    %c0_i32 = arith.constant 0 : i32
    %c0_i32_0 = arith.constant 0 : i32
    %c0_i32_1 = arith.constant 0 : i32
    return %c0_i32, %c0_i32_0 : i32, i32
  }
  func.func @transform_5(%arg0: i32) -> (i32, i32) {
    %c0_i32 = arith.constant 0 : i32
    %c0_i32_0 = arith.constant 0 : i32
    %c0_i32_1 = arith.constant 0 : i32
    return %c0_i32, %c0_i32_0 : i32, i32
  }
  func.func @transform_6(%arg0: i32) -> (i32, i32) {
    %c0_i32 = arith.constant 0 : i32
    %c0_i32_0 = arith.constant 0 : i32
    %c0_i32_1 = arith.constant 0 : i32
    return %c0_i32, %c0_i32_0 : i32, i32
  }
  func.func @transform_7(%arg0: i32) -> (i32, i32, i32) {
    %c0_i32 = arith.constant 0 : i32
    %c0_i32_0 = arith.constant 0 : i32
    %c0_i32_1 = arith.constant 0 : i32
    return %arg0, %c0_i32, %c0_i32_0 : i32, i32, i32
  }
}

</mosaic_0001>

<llo_original>
// kernel: tpu_custom_call.1
$region0: #{tpu_custom_call.1}
  #allocation0 [shape = 'u32[]', space=smem, size = 0x4, offset = 0x4, fixed_abs, tag = 'smem constant byte address 0x4 - core index']
  #allocation1 [shape = 'u32[144,128]{1,0:T(1,128)}', space=vmem, size = 0x12000, scoped, tag = 'internal scratch']
  %s0 = inlined_call_operand.vmem [shape: f32[2,8,32], index: 0, kind: input, shape index: {}]
  %s1 = inlined_call_operand.vmem [shape: f32[4,32,24], index: 1, kind: input, shape index: {}]
  %s2 = inlined_call_operand.vmem [shape: f32[4,8,32], index: 2, kind: input, shape index: {}]
  %s3 = inlined_call_operand.vmem [shape: f32[32,128], index: 3, kind: input, shape index: {}]
  %s4 = inlined_call_operand.vmem [shape: f32[1,128], index: 4, kind: input, shape index: {}]
  %s5 = inlined_call_operand.vmem [shape: f32[128,32], index: 5, kind: input, shape index: {}]
  %s6 = inlined_call_operand.vmem [shape: f32[1,32], index: 6, kind: input, shape index: {}]
  %s7 = inlined_call_operand.hbm [shape: f32[2,8,32], index: 7, kind: output, shape index: {}]
  %s8 = sld [smem:[#allocation0]]
  $region61: #{tpu_custom_call.1} parent=0
    _
  %s10 = ssub.s32 1, %s8
  %s11 = scalar_select 0, %s10, %s8
  $region1: #{tpu_custom_call.1} parent=0
    #allocation2 [shape = 'u8[8192]{0}', space=vmem, size = 0x2000, scoped, tag = 'output window, operand 0']
    #allocation3 [shape = 's32[2]{0}', space=sflag, size = 0x8, scoped, tag = 'scoped memory for tpu_custom_call.1']
    %12 = vsyncpa [#allocation3], 0
    %s13 = scalar_lea.sflag [#allocation3], 1
    %14 = vsyncpa %s13, 0
    loop: start=0, step=1, limit=4
    $region2: #{tpu_custom_call.1} parent=1 // loop_pre_header
      _
    $region3: #{tpu_custom_call.1} parent=1 // loop_header
      %s16 = sphi 0, %s20
      %p17 = scmp.ge.s32.totalorder %s16, 4
      %s26 = sphi 0, %s28
      %s29 = sphi 0, %s26
      %s30 = sphi 0, %s29
      %s46 = sphi 0, %s30
      %s50 = sphi 0, %s50
      %s52 = sphi 0, %s50
      %s53 = sphi 0, %s52
      %s67 = sphi 0, %s53
      %s71 = sphi 0, %s71
      %s73 = sphi 0, %s71
      %s74 = sphi 0, %s73
      %s88 = sphi 0, %s74
      %s92 = sphi 0, %s92
      %s94 = sphi 0, %s92
      %s95 = sphi 0, %s94
      %s109 = sphi 0, %s95
      %s113 = sphi 0, %s113
      %s115 = sphi 0, %s113
      %s116 = sphi 0, %s115
      %s130 = sphi 0, %s116
      %s134 = sphi 0, %s134
      %s136 = sphi 0, %s134
      %s137 = sphi 0, %s136
      %s151 = sphi 0, %s137
      %s155 = sphi 0, %s155
      %s157 = sphi 0, %s155
      %s158 = sphi 0, %s157
      %s172 = sphi 0, %s158
      %s178 = sphi 0, %s180
      %s181 = sphi 0, %s178
      %s182 = sphi 0, %s181
      %s198 = sphi 0, %s182
    $region4: #{tpu_custom_call.1} parent=1 // loop_header_branch
      %19 = sbr.rel (%p17) target = $region8
    $region5: #{tpu_custom_call.1} parent=1 // loop_body
      %s21 = ssub.s32 %s16, 1
      %s22 = ssub.s32 %s16, 2
      %s23 = sadd.s32 %s16, 1
      %s24 = ssub.s32 %s16, %s23
      %p25 = scmp.eq.s32.totalorder %s24, 0
      %s27 = sadd.s32 %s26, 1
      %s28 = scalar_select %p25, %s26, %s27
      %p31 = pneg %p25
      %p32 = scmp.eq.s32.totalorder %s16, 1
      %p33 = por %p31, %p32
      %p34 = scmp.ne.s32.totalorder %s26, %s29
      %p35 = scmp.eq.s32.totalorder %s16, 0
      %p36 = por %p34, %p35
      %p37 = scmp.ne.s32.totalorder %s26, %s29
      %p38 = scmp.eq.s32.totalorder %s21, 1
      %p39 = por %p37, %p38
      %p40 = scmp.ne.s32.totalorder %s29, %s30
      %p41 = scmp.eq.s32.totalorder %s21, 0
      %p42 = por %p40, %p41
      %p43 = scmp.ne.s32.totalorder %s29, %s30
      %p44 = scmp.eq.s32.totalorder %s22, 1
      %p45 = por %p43, %p44
      %p47 = scmp.ne.s32.totalorder %s30, %s46
      %p48 = scmp.eq.s32.totalorder %s22, 0
      %p49 = por %p47, %p48
      %s51 = sadd.s32 %s50, 1
      %p54 = scmp.eq.s32.totalorder %s16, 1
      %p55 = scmp.ne.s32.totalorder %s50, %s52
      %p56 = scmp.eq.s32.totalorder %s16, 0
      %p57 = por %p55, %p56
      %p58 = scmp.ne.s32.totalorder %s50, %s52
      %p59 = scmp.eq.s32.totalorder %s21, 1
      %p60 = por %p58, %p59
      %p61 = scmp.ne.s32.totalorder %s52, %s53
      %p62 = scmp.eq.s32.totalorder %s21, 0
      %p63 = por %p61, %p62
      %p64 = scmp.ne.s32.totalorder %s52, %s53
      %p65 = scmp.eq.s32.totalorder %s22, 1
      %p66 = por %p64, %p65
      %p68 = scmp.ne.s32.totalorder %s53, %s67
      %p69 = scmp.eq.s32.totalorder %s22, 0
      %p70 = por %p68, %p69
      %s72 = sadd.s32 %s71, 1
      %p75 = scmp.eq.s32.totalorder %s16, 1
      %p76 = scmp.ne.s32.totalorder %s71, %s73
      %p77 = scmp.eq.s32.totalorder %s16, 0
      %p78 = por %p76, %p77
      %p79 = scmp.ne.s32.totalorder %s71, %s73
      %p80 = scmp.eq.s32.totalorder %s21, 1
      %p81 = por %p79, %p80
      %p82 = scmp.ne.s32.totalorder %s73, %s74
      %p83 = scmp.eq.s32.totalorder %s21, 0
      %p84 = por %p82, %p83
      %p85 = scmp.ne.s32.totalorder %s73, %s74
      %p86 = scmp.eq.s32.totalorder %s22, 1
      %p87 = por %p85, %p86
      %p89 = scmp.ne.s32.totalorder %s74, %s88
      %p90 = scmp.eq.s32.totalorder %s22, 0
      %p91 = por %p89, %p90
      %s93 = sadd.s32 %s92, 1
      %p96 = scmp.eq.s32.totalorder %s16, 1
      %p97 = scmp.ne.s32.totalorder %s92, %s94
      %p98 = scmp.eq.s32.totalorder %s16, 0
      %p99 = por %p97, %p98
      %p100 = scmp.ne.s32.totalorder %s92, %s94
      %p101 = scmp.eq.s32.totalorder %s21, 1
      %p102 = por %p100, %p101
      %p103 = scmp.ne.s32.totalorder %s94, %s95
      %p104 = scmp.eq.s32.totalorder %s21, 0
      %p105 = por %p103, %p104
      %p106 = scmp.ne.s32.totalorder %s94, %s95
      %p107 = scmp.eq.s32.totalorder %s22, 1
      %p108 = por %p106, %p107
      %p110 = scmp.ne.s32.totalorder %s95, %s109
      %p111 = scmp.eq.s32.totalorder %s22, 0
      %p112 = por %p110, %p111
      %s114 = sadd.s32 %s113, 1
      %p117 = scmp.eq.s32.totalorder %s16, 1
      %p118 = scmp.ne.s32.totalorder %s113, %s115
      %p119 = scmp.eq.s32.totalorder %s16, 0
      %p120 = por %p118, %p119
      %p121 = scmp.ne.s32.totalorder %s113, %s115
      %p122 = scmp.eq.s32.totalorder %s21, 1
      %p123 = por %p121, %p122
      %p124 = scmp.ne.s32.totalorder %s115, %s116
      %p125 = scmp.eq.s32.totalorder %s21, 0
      %p126 = por %p124, %p125
      %p127 = scmp.ne.s32.totalorder %s115, %s116
      %p128 = scmp.eq.s32.totalorder %s22, 1
      %p129 = por %p127, %p128
      %p131 = scmp.ne.s32.totalorder %s116, %s130
      %p132 = scmp.eq.s32.totalorder %s22, 0
      %p133 = por %p131, %p132
      %s135 = sadd.s32 %s134, 1
      %p138 = scmp.eq.s32.totalorder %s16, 1
      %p139 = scmp.ne.s32.totalorder %s134, %s136
      %p140 = scmp.eq.s32.totalorder %s16, 0
      %p141 = por %p139, %p140
      %p142 = scmp.ne.s32.totalorder %s134, %s136
      %p143 = scmp.eq.s32.totalorder %s21, 1
      %p144 = por %p142, %p143
      %p145 = scmp.ne.s32.totalorder %s136, %s137
      %p146 = scmp.eq.s32.totalorder %s21, 0
      %p147 = por %p145, %p146
      %p148 = scmp.ne.s32.totalorder %s136, %s137
      %p149 = scmp.eq.s32.totalorder %s22, 1
      %p150 = por %p148, %p149
      %p152 = scmp.ne.s32.totalorder %s137, %s151
      %p153 = scmp.eq.s32.totalorder %s22, 0
      %p154 = por %p152, %p153
      %s156 = sadd.s32 %s155, 1
      %p159 = scmp.eq.s32.totalorder %s16, 1
      %p160 = scmp.ne.s32.totalorder %s155, %s157
      %p161 = scmp.eq.s32.totalorder %s16, 0
      %p162 = por %p160, %p161
      %p163 = scmp.ne.s32.totalorder %s155, %s157
      %p164 = scmp.eq.s32.totalorder %s21, 1
      %p165 = por %p163, %p164
      %p166 = scmp.ne.s32.totalorder %s157, %s158
      %p167 = scmp.eq.s32.totalorder %s21, 0
      %p168 = por %p166, %p167
      %p169 = scmp.ne.s32.totalorder %s157, %s158
      %p170 = scmp.eq.s32.totalorder %s22, 1
      %p171 = por %p169, %p170
      %p173 = scmp.ne.s32.totalorder %s158, %s172
      %p174 = scmp.eq.s32.totalorder %s22, 0
      %p175 = por %p173, %p174
      %s176 = ssub.s32 %s16, %s23
      %p177 = scmp.eq.s32.totalorder %s176, 0
      %s179 = sadd.s32 %s178, 1
      %s180 = scalar_select %p177, %s178, %s179
      %p183 = pneg %p177
      %p184 = scmp.eq.s32.totalorder %s16, 1
      %p185 = por %p183, %p184
      %p186 = scmp.ne.s32.totalorder %s178, %s181
      %p187 = scmp.eq.s32.totalorder %s16, 0
      %p188 = por %p186, %p187
      %p189 = scmp.ne.s32.totalorder %s178, %s181
      %p190 = scmp.eq.s32.totalorder %s21, 1
      %p191 = por %p189, %p190
      %p192 = scmp.ne.s32.totalorder %s181, %s182
      %p193 = scmp.eq.s32.totalorder %s21, 0
      %p194 = por %p192, %p193
      %p195 = scmp.ne.s32.totalorder %s181, %s182
      %p196 = scmp.eq.s32.totalorder %s22, 1
      %p197 = por %p195, %p196
      %p199 = scmp.ne.s32.totalorder %s182, %s198
      %p200 = scmp.eq.s32.totalorder %s22, 0
      %p201 = por %p199, %p200
      %p202 = scmp.le.s32.totalorder 1, %s16
      %p203 = scmp.lt.s32.totalorder %s16, 3
      %p204 = pnand %p202, %p203
      %p205 = pneg %p204
      // Predicated region
      $region9: #{tpu_custom_call.1} parent=5 // pred_check
        _
      $region10: #{tpu_custom_call.1} parent=5 // pred_check_branch
        %207 = sbr.rel (%p204) target = $region12
      $region11: #{tpu_custom_call.1} parent=5 // pred_region
        %s208 = ssub.s32 %s16, 1
        // Predicated region
        $region13: #{tpu_custom_call.1} parent=11 // pred_check
          %p209 = pneg %p63
        $region14: #{tpu_custom_call.1} parent=11 // pred_check_branch
          %211 = sbr.rel (%p209) target = $region16
        $region15: #{tpu_custom_call.1} parent=11 // pred_region
          _
        $region16: #{tpu_custom_call.1} parent=11 // pred_fallthru
          _
        // Predicated region
        $region17: #{tpu_custom_call.1} parent=11 // pred_check
          %p212 = pneg %p84
        $region18: #{tpu_custom_call.1} parent=11 // pred_check_branch
          %214 = sbr.rel (%p212) target = $region20
        $region19: #{tpu_custom_call.1} parent=11 // pred_region
          _
        $region20: #{tpu_custom_call.1} parent=11 // pred_fallthru
          _
        // Predicated region
        $region21: #{tpu_custom_call.1} parent=11 // pred_check
          %p215 = pneg %p105
        $region22: #{tpu_custom_call.1} parent=11 // pred_check_branch
          %217 = sbr.rel (%p215) target = $region24
        $region23: #{tpu_custom_call.1} parent=11 // pred_region
          _
        $region24: #{tpu_custom_call.1} parent=11 // pred_fallthru
          _
        // Predicated region
        $region25: #{tpu_custom_call.1} parent=11 // pred_check
          %p218 = pneg %p126
        $region26: #{tpu_custom_call.1} parent=11 // pred_check_branch
          %220 = sbr.rel (%p218) target = $region28
        $region27: #{tpu_custom_call.1} parent=11 // pred_region
          _
        $region28: #{tpu_custom_call.1} parent=11 // pred_fallthru
          _
        // Predicated region
        $region29: #{tpu_custom_call.1} parent=11 // pred_check
          %p221 = pneg %p147
        $region30: #{tpu_custom_call.1} parent=11 // pred_check_branch
          %223 = sbr.rel (%p221) target = $region32
        $region31: #{tpu_custom_call.1} parent=11 // pred_region
          _
        $region32: #{tpu_custom_call.1} parent=11 // pred_fallthru
          _
        // Predicated region
        $region33: #{tpu_custom_call.1} parent=11 // pred_check
          %p224 = pneg %p168
        $region34: #{tpu_custom_call.1} parent=11 // pred_check_branch
          %226 = sbr.rel (%p224) target = $region36
        $region35: #{tpu_custom_call.1} parent=11 // pred_region
          _
        $region36: #{tpu_custom_call.1} parent=11 // pred_fallthru
          _
      $region12: #{tpu_custom_call.1} parent=5 // pred_fallthru
        _
      %p227 = scmp.lt.s32.totalorder %s16, 2
      // Predicated region
      $region37: #{tpu_custom_call.1} parent=5 // pred_check
        %p228 = pneg %p227
      $region38: #{tpu_custom_call.1} parent=5 // pred_check_branch
        %230 = sbr.rel (%p228) target = $region40
      $region39: #{tpu_custom_call.1} parent=5 // pred_region
        // Predicated region
        $region41: #{tpu_custom_call.1} parent=39 // pred_check
          %p231 = pneg %p36
        $region42: #{tpu_custom_call.1} parent=39 // pred_check_branch
          %233 = sbr.rel (%p231) target = $region44
        $region43: #{tpu_custom_call.1} parent=39 // pred_region
          %p234 = scmp.lt.s32.totalorder %s16, 1
          %s235 = scalar_select %p234, %s16, 1
          %s236 = smul.addr %s235, 8
          %s237 = scalar_lea.vmem %s0, %s236
        $region44: #{tpu_custom_call.1} parent=39 // pred_fallthru
          _
      $region40: #{tpu_custom_call.1} parent=5 // pred_fallthru
        _
      %p238 = scmp.le.s32.totalorder 1, %s16
      %p239 = scmp.lt.s32.totalorder %s16, 3
      %p240 = pnand %p238, %p239
      %p241 = pneg %p240
      // Predicated region
      $region45: #{tpu_custom_call.1} parent=5 // pred_check
        _
      $region46: #{tpu_custom_call.1} parent=5 // pred_check_branch
        %243 = sbr.rel (%p240) target = $region48
      $region47: #{tpu_custom_call.1} parent=5 // pred_region
        %s244 = ssub.s32 %s16, 1
        %p245 = scmp.lt.s32.totalorder %s21, 1
        %s246 = scalar_select %p245, %s21, 1
        %s247 = smul.addr %s246, 8
        %s248 = scalar_lea.vmem %s0, %s247
        %p249 = pneg %p42
        %p250 = pneg %p39
        %p251 = pneg %p63
        %p252 = pneg %p60
        %p253 = pneg %p84
        %p254 = pneg %p81
        %p255 = pneg %p105
        %p256 = pneg %p102
        %p257 = pneg %p126
        %p258 = pneg %p123
        %p259 = pneg %p147
        %p260 = pneg %p144
        %p261 = pneg %p168
        %p262 = pneg %p165
        %p263 = pneg %p194
        %p264 = pneg %p191
        %s265 = sand.u32 %s181, 1
        %s266 = scalar_lea.sflag [#allocation3], %s265
        %s267 = sand.u32 %s181, 1
        %s268 = smul.addr %s267, 8
        %s269 = scalar_lea.vmem [#allocation2], %s268
        %p270 = scmp.lt.s32.totalorder %s21, 1
        %s271 = scalar_select %p270, %s21, 1
        %s272 = smul.addr %s271, 8
        %s273 = scalar_lea.vmem %s0, %s272
        %v274 = vld [vmem:[%s273] sm:$0xff]
        %v275 = vld [vmem:[%s1] sm:$0xff]
        %v276 = vld [vmem:[%s1 + $0x8] sm:$0xff]
        %v277 = vld [vmem:[%s1 + $0x10] sm:$0xff]
        %v278 = vld [vmem:[%s1 + $0x18] sm:$0xff]
        %v279 = vld [vmem:[%s1 + $0x20] sm:$0xff]
        %v280 = vld [vmem:[%s1 + $0x28] sm:$0xff]
        %v281 = vld [vmem:[%s1 + $0x30] sm:$0xff]
        %v282 = vld [vmem:[%s1 + $0x38] sm:$0xff]
        %v283 = vld [vmem:[%s1 + $0x40] sm:$0xff]
        %v284 = vld [vmem:[%s1 + $0x48] sm:$0xff]
        %v285 = vld [vmem:[%s1 + $0x50] sm:$0xff]
        %v286 = vld [vmem:[%s1 + $0x58] sm:$0xff]
        %v287 = vld [vmem:[%s1 + $0x60] sm:$0xff]
        %v288 = vld [vmem:[%s1 + $0x68] sm:$0xff]
        %v289 = vld [vmem:[%s1 + $0x70] sm:$0xff]
        %v290 = vld [vmem:[%s1 + $0x78] sm:$0xff]
        %vm291 = vcmask 261120
        %v293 = vsel %vm291, %v274, 0
        %295 = vmatprep.subr.mxu0 0.0
        %296 = vmatpush1.msra.mxu0 0.0
        %297 = vmatprep.subr.mxu0 0.0
        %298 = vmatpush1.msra.mxu0 0.0
        %299 = vmatprep.subr.mxu0 0.0
        %300 = vmatpush1.msra.mxu0 0.0
        %301 = vmatprep.subr.mxu0 0.0
        %302 = vmatpush1.msra.mxu0 0.0
        %303 = vmatprep.subr.mxu0 0.0
        %304 = vmatpush1.msra.mxu0 0.0
        %305 = vmatprep.subr.mxu0 0.0
        %306 = vmatpush1.msra.mxu0 0.0
        %307 = vmatprep.subr.mxu0 0.0
        %308 = vmatpush1.msra.mxu0 0.0
        %309 = vmatprep.subr.mxu0 0.0
        %310 = vmatpush1.msra.mxu0 0.0
        %311 = vmatprep.subr.mxu0 0.0
        %312 = vmatpush1.msra.mxu0 0.0
        %313 = vmatprep.subr.mxu0 0.0
        %314 = vmatpush1.msra.mxu0 0.0
        %315 = vmatprep.subr.mxu0 0.0
        %316 = vmatpush1.msra.mxu0 0.0
        %317 = vmatprep.subr.mxu0 0.0
        %318 = vmatpush1.msra.mxu0 0.0
        %319 = vmatprep.subr.mxu0 0.0
        %320 = vmatpush1.msra.mxu0 %v278
        %321 = vmatprep.subr.mxu0 0.0
        %322 = vmatpush1.msra.mxu0 %v277
        %323 = vmatprep.subr.mxu0 0.0
        %324 = vmatpush1.msra.mxu0 %v276
        %325 = vmatprep.subr.mxu0 0.0
        %326 = vmatpush1.msra.mxu0 %v275
        %327 = vmatprep.subr.mxu0 0.0
        %328 = vmatpush2.msra.mxu0 0.0
        %329 = vmatprep.subr.mxu0 0.0
        %330 = vmatpush2.msra.mxu0 0.0
        %331 = vmatprep.subr.mxu0 0.0
        %332 = vmatpush2.msra.mxu0 0.0
        %333 = vmatprep.subr.mxu0 0.0
        %334 = vmatpush2.msra.mxu0 0.0
        %335 = vmatprep.subr.mxu0 0.0
        %336 = vmatpush2.msra.mxu0 0.0
        %337 = vmatprep.subr.mxu0 0.0
        %338 = vmatpush2.msra.mxu0 0.0
        %339 = vmatprep.subr.mxu0 0.0
        %340 = vmatpush2.msra.mxu0 0.0
        %341 = vmatprep.subr.mxu0 0.0
        %342 = vmatpush2.msra.mxu0 0.0
        %343 = vmatprep.subr.mxu0 0.0
        %344 = vmatpush2.msra.mxu0 0.0
        %345 = vmatprep.subr.mxu0 0.0
        %346 = vmatpush2.msra.mxu0 0.0
        %347 = vmatprep.subr.mxu0 0.0
        %348 = vmatpush2.msra.mxu0 0.0
        %349 = vmatprep.subr.mxu0 0.0
        %350 = vmatpush2.msra.mxu0 0.0
        %351 = vmatprep.subr.mxu0 0.0
        %352 = vmatpush2.msra.mxu0 0.0
        %353 = vmatprep.subr.mxu0 0.0
        %354 = vmatpush2.msra.mxu0 0.0
        %355 = vmatprep.subr.mxu0 0.0
        %356 = vmatpush2.msra.mxu0 0.0
        %357 = vmatprep.subr.mxu0 0.0
        %358 = vmatpush2.msra.mxu0 0.0
        %359 = vmatprep.mubr.f32.mxu0 0.0
        %360 = vmatmul.mubr.f32.gmra.mxu0 %v293
        %v361 = vpop.f32.mrf.mxu0
        %v362 = vadd.f32 0.0, %v361
        %v363 = vpop.f32.mrf.mxu0
        %364 = vdwg.mxu0
        %365 = vmatprep.subr.mxu0 0.0
        %366 = vmatpush1.msra.mxu0 0.0
        %367 = vmatprep.subr.mxu0 0.0
        %368 = vmatpush1.msra.mxu0 0.0
        %369 = vmatprep.subr.mxu0 0.0
        %370 = vmatpush1.msra.mxu0 0.0
        %371 = vmatprep.subr.mxu0 0.0
        %372 = vmatpush1.msra.mxu0 0.0
        %373 = vmatprep.subr.mxu0 0.0
        %374 = vmatpush1.msra.mxu0 0.0
        %375 = vmatprep.subr.mxu0 0.0
        %376 = vmatpush1.msra.mxu0 0.0
        %377 = vmatprep.subr.mxu0 0.0
        %378 = vmatpush1.msra.mxu0 0.0
        %379 = vmatprep.subr.mxu0 0.0
        %380 = vmatpush1.msra.mxu0 0.0
        %381 = vmatprep.subr.mxu0 0.0
        %382 = vmatpush1.msra.mxu0 0.0
        %383 = vmatprep.subr.mxu0 0.0
        %384 = vmatpush1.msra.mxu0 0.0
        %385 = vmatprep.subr.mxu0 0.0
        %386 = vmatpush1.msra.mxu0 0.0
        %387 = vmatprep.subr.mxu0 0.0
        %388 = vmatpush1.msra.mxu0 0.0
        %389 = vmatprep.subr.mxu0 0.0
        %390 = vmatpush1.msra.mxu0 %v282
        %391 = vmatprep.subr.mxu0 0.0
        %392 = vmatpush1.msra.mxu0 %v281
        %393 = vmatprep.subr.mxu0 0.0
        %394 = vmatpush1.msra.mxu0 %v280
        %395 = vmatprep.subr.mxu0 0.0
        %396 = vmatpush1.msra.mxu0 %v279
        %397 = vmatprep.subr.mxu0 0.0
        %398 = vmatpush2.msra.mxu0 0.0
        %399 = vmatprep.subr.mxu0 0.0
        %400 = vmatpush2.msra.mxu0 0.0
        %401 = vmatprep.subr.mxu0 0.0
        %402 = vmatpush2.msra.mxu0 0.0
        %403 = vmatprep.subr.mxu0 0.0
        %404 = vmatpush2.msra.mxu0 0.0
        %405 = vmatprep.subr.mxu0 0.0
        %406 = vmatpush2.msra.mxu0 0.0
        %407 = vmatprep.subr.mxu0 0.0
        %408 = vmatpush2.msra.mxu0 0.0
        %409 = vmatprep.subr.mxu0 0.0
        %410 = vmatpush2.msra.mxu0 0.0
        %411 = vmatprep.subr.mxu0 0.0
        %412 = vmatpush2.msra.mxu0 0.0
        %413 = vmatprep.subr.mxu0 0.0
        %414 = vmatpush2.msra.mxu0 0.0
        %415 = vmatprep.subr.mxu0 0.0
        %416 = vmatpush2.msra.mxu0 0.0
        %417 = vmatprep.subr.mxu0 0.0
        %418 = vmatpush2.msra.mxu0 0.0
        %419 = vmatprep.subr.mxu0 0.0
        %420 = vmatpush2.msra.mxu0 0.0
        %421 = vmatprep.subr.mxu0 0.0
        %422 = vmatpush2.msra.mxu0 0.0
        %423 = vmatprep.subr.mxu0 0.0
        %424 = vmatpush2.msra.mxu0 0.0
        %425 = vmatprep.subr.mxu0 0.0
        %426 = vmatpush2.msra.mxu0 0.0
        %427 = vmatprep.subr.mxu0 0.0
        %428 = vmatpush2.msra.mxu0 0.0
        %429 = vmatprep.mubr.f32.mxu0 0.0
        %430 = vmatmul.mubr.f32.gmra.mxu0 %v293
        %v431 = vpop.f32.mrf.mxu0
        %v432 = vadd.f32 0.0, %v431
        %v433 = vpop.f32.mrf.mxu0
        %434 = vdwg.mxu0
        %435 = vmatprep.subr.mxu0 0.0
        %436 = vmatpush1.msra.mxu0 0.0
        %437 = vmatprep.subr.mxu0 0.0
        %438 = vmatpush1.msra.mxu0 0.0
        %439 = vmatprep.subr.mxu0 0.0
        %440 = vmatpush1.msra.mxu0 0.0
        %441 = vmatprep.subr.mxu0 0.0
        %442 = vmatpush1.msra.mxu0 0.0
        %443 = vmatprep.subr.mxu0 0.0
        %444 = vmatpush1.msra.mxu0 0.0
        %445 = vmatprep.subr.mxu0 0.0
        %446 = vmatpush1.msra.mxu0 0.0
        %447 = vmatprep.subr.mxu0 0.0
        %448 = vmatpush1.msra.mxu0 0.0
        %449 = vmatprep.subr.mxu0 0.0
        %450 = vmatpush1.msra.mxu0 0.0
        %451 = vmatprep.subr.mxu0 0.0
        %452 = vmatpush1.msra.mxu0 0.0
        %453 = vmatprep.subr.mxu0 0.0
        %454 = vmatpush1.msra.mxu0 0.0
        %455 = vmatprep.subr.mxu0 0.0
        %456 = vmatpush1.msra.mxu0 0.0
        %457 = vmatprep.subr.mxu0 0.0
        %458 = vmatpush1.msra.mxu0 0.0
        %459 = vmatprep.subr.mxu0 0.0
        %460 = vmatpush1.msra.mxu0 %v286
        %461 = vmatprep.subr.mxu0 0.0
        %462 = vmatpush1.msra.mxu0 %v285
        %463 = vmatprep.subr.mxu0 0.0
        %464 = vmatpush1.msra.mxu0 %v284
        %465 = vmatprep.subr.mxu0 0.0
        %466 = vmatpush1.msra.mxu0 %v283
        %467 = vmatprep.subr.mxu0 0.0
        %468 = vmatpush2.msra.mxu0 0.0
        %469 = vmatprep.subr.mxu0 0.0
        %470 = vmatpush2.msra.mxu0 0.0
        %471 = vmatprep.subr.mxu0 0.0
        %472 = vmatpush2.msra.mxu0 0.0
        %473 = vmatprep.subr.mxu0 0.0
        %474 = vmatpush2.msra.mxu0 0.0
        %475 = vmatprep.subr.mxu0 0.0
        %476 = vmatpush2.msra.mxu0 0.0
        %477 = vmatprep.subr.mxu0 0.0
        %478 = vmatpush2.msra.mxu0 0.0
        %479 = vmatprep.subr.mxu0 0.0
        %480 = vmatpush2.msra.mxu0 0.0
        %481 = vmatprep.subr.mxu0 0.0
        %482 = vmatpush2.msra.mxu0 0.0
        %483 = vmatprep.subr.mxu0 0.0
        %484 = vmatpush2.msra.mxu0 0.0
        %485 = vmatprep.subr.mxu0 0.0
        %486 = vmatpush2.msra.mxu0 0.0
        %487 = vmatprep.subr.mxu0 0.0
        %488 = vmatpush2.msra.mxu0 0.0
        %489 = vmatprep.subr.mxu0 0.0
        %490 = vmatpush2.msra.mxu0 0.0
        %491 = vmatprep.subr.mxu0 0.0
        %492 = vmatpush2.msra.mxu0 0.0
        %493 = vmatprep.subr.mxu0 0.0
        %494 = vmatpush2.msra.mxu0 0.0
        %495 = vmatprep.subr.mxu0 0.0
        %496 = vmatpush2.msra.mxu0 0.0
        %497 = vmatprep.subr.mxu0 0.0
        %498 = vmatpush2.msra.mxu0 0.0
        %499 = vmatprep.mubr.f32.mxu0 0.0
        %500 = vmatmul.mubr.f32.gmra.mxu0 %v293
        %v501 = vpop.f32.mrf.mxu0
        %v502 = vadd.f32 0.0, %v501
        %v503 = vpop.f32.mrf.mxu0
        %504 = vdwg.mxu0
        %505 = vmatprep.subr.mxu0 0.0
        %506 = vmatpush1.msra.mxu0 0.0
        %507 = vmatprep.subr.mxu0 0.0
        %508 = vmatpush1.msra.mxu0 0.0
        %509 = vmatprep.subr.mxu0 0.0
        %510 = vmatpush1.msra.mxu0 0.0
        %511 = vmatprep.subr.mxu0 0.0
        %512 = vmatpush1.msra.mxu0 0.0
        %513 = vmatprep.subr.mxu0 0.0
        %514 = vmatpush1.msra.mxu0 0.0
        %515 = vmatprep.subr.mxu0 0.0
        %516 = vmatpush1.msra.mxu0 0.0
        %517 = vmatprep.subr.mxu0 0.0
        %518 = vmatpush1.msra.mxu0 0.0
        %519 = vmatprep.subr.mxu0 0.0
        %520 = vmatpush1.msra.mxu0 0.0
        %521 = vmatprep.subr.mxu0 0.0
        %522 = vmatpush1.msra.mxu0 0.0
        %523 = vmatprep.subr.mxu0 0.0
        %524 = vmatpush1.msra.mxu0 0.0
        %525 = vmatprep.subr.mxu0 0.0
        %526 = vmatpush1.msra.mxu0 0.0
        %527 = vmatprep.subr.mxu0 0.0
        %528 = vmatpush1.msra.mxu0 0.0
        %529 = vmatprep.subr.mxu0 0.0
        %530 = vmatpush1.msra.mxu0 %v290
        %531 = vmatprep.subr.mxu0 0.0
        %532 = vmatpush1.msra.mxu0 %v289
        %533 = vmatprep.subr.mxu0 0.0
        %534 = vmatpush1.msra.mxu0 %v288
        %535 = vmatprep.subr.mxu0 0.0
        %536 = vmatpush1.msra.mxu0 %v287
        %537 = vmatprep.subr.mxu0 0.0
        %538 = vmatpush2.msra.mxu0 0.0
        %539 = vmatprep.subr.mxu0 0.0
        %540 = vmatpush2.msra.mxu0 0.0
        %541 = vmatprep.subr.mxu0 0.0
        %542 = vmatpush2.msra.mxu0 0.0
        %543 = vmatprep.subr.mxu0 0.0
        %544 = vmatpush2.msra.mxu0 0.0
        %545 = vmatprep.subr.mxu0 0.0
        %546 = vmatpush2.msra.mxu0 0.0
        %547 = vmatprep.subr.mxu0 0.0
        %548 = vmatpush2.msra.mxu0 0.0
        %549 = vmatprep.subr.mxu0 0.0
        %550 = vmatpush2.msra.mxu0 0.0
        %551 = vmatprep.subr.mxu0 0.0
        %552 = vmatpush2.msra.mxu0 0.0
        %553 = vmatprep.subr.mxu0 0.0
        %554 = vmatpush2.msra.mxu0 0.0
        %555 = vmatprep.subr.mxu0 0.0
        %556 = vmatpush2.msra.mxu0 0.0
        %557 = vmatprep.subr.mxu0 0.0
        %558 = vmatpush2.msra.mxu0 0.0
        %559 = vmatprep.subr.mxu0 0.0
        %560 = vmatpush2.msra.mxu0 0.0
        %561 = vmatprep.subr.mxu0 0.0
        %562 = vmatpush2.msra.mxu0 0.0
        %563 = vmatprep.subr.mxu0 0.0
        %564 = vmatpush2.msra.mxu0 0.0
        %565 = vmatprep.subr.mxu0 0.0
        %566 = vmatpush2.msra.mxu0 0.0
        %567 = vmatprep.subr.mxu0 0.0
        %568 = vmatpush2.msra.mxu0 0.0
        %569 = vmatprep.mubr.f32.mxu0 0.0
        %570 = vmatmul.mubr.f32.gmra.mxu0 %v293
        %v571 = vpop.f32.mrf.mxu0
        %v572 = vadd.f32 0.0, %v571
        %v573 = vpop.f32.mrf.mxu0
        %574 = vdwg.mxu0
        %576 = vrot.lane.b32.xlu0 %v362, 120
        %v577 = vpop.permute.xlu0 %576
        %vm578 = vcmask 64512
        %v579 = vsel %vm578, %v362, 0
        %v581 = vsel %vm578, %v577, 0
        %583 = vmatprep.subr.mxu0 0.0
        %584 = vmatpush1.xpose.msra.mxu0 0.0
        %585 = vmatprep.subr.mxu0 0.0
        %586 = vmatpush1.xpose.msra.mxu0 0.0
        %587 = vmatprep.subr.mxu0 0.0
        %588 = vmatpush1.xpose.msra.mxu0 0.0
        %589 = vmatprep.subr.mxu0 0.0
        %590 = vmatpush1.xpose.msra.mxu0 0.0
        %591 = vmatprep.subr.mxu0 0.0
        %592 = vmatpush1.xpose.msra.mxu0 0.0
        %593 = vmatprep.subr.mxu0 0.0
        %594 = vmatpush1.xpose.msra.mxu0 0.0
        %595 = vmatprep.subr.mxu0 0.0
        %596 = vmatpush1.xpose.msra.mxu0 0.0
        %597 = vmatprep.subr.mxu0 0.0
        %598 = vmatpush1.xpose.msra.mxu0 0.0
        %599 = vmatprep.subr.mxu0 0.0
        %600 = vmatpush1.xpose.msra.mxu0 0.0
        %601 = vmatprep.subr.mxu0 0.0
        %602 = vmatpush1.xpose.msra.mxu0 0.0
        %603 = vmatprep.subr.mxu0 0.0
        %604 = vmatpush1.xpose.msra.mxu0 0.0
        %605 = vmatprep.subr.mxu0 0.0
        %606 = vmatpush1.xpose.msra.mxu0 0.0
        %607 = vmatprep.subr.mxu0 0.0
        %608 = vmatpush1.xpose.msra.mxu0 0.0
        %609 = vmatprep.subr.mxu0 0.0
        %610 = vmatpush1.xpose.msra.mxu0 0.0
        %611 = vmatprep.subr.mxu0 0.0
        %612 = vmatpush1.xpose.msra.mxu0 0.0
        %613 = vmatprep.subr.mxu0 0.0
        %614 = vmatpush1.xpose.msra.mxu0 %v581
        %615 = vmatprep.subr.mxu0 0.0
        %616 = vmatpush2.xpose.msra.mxu0 0.0
        %617 = vmatprep.subr.mxu0 0.0
        %618 = vmatpush2.xpose.msra.mxu0 0.0
        %619 = vmatprep.subr.mxu0 0.0
        %620 = vmatpush2.xpose.msra.mxu0 0.0
        %621 = vmatprep.subr.mxu0 0.0
        %622 = vmatpush2.xpose.msra.mxu0 0.0
        %623 = vmatprep.subr.mxu0 0.0
        %624 = vmatpush2.xpose.msra.mxu0 0.0
        %625 = vmatprep.subr.mxu0 0.0
        %626 = vmatpush2.xpose.msra.mxu0 0.0
        %627 = vmatprep.subr.mxu0 0.0
        %628 = vmatpush2.xpose.msra.mxu0 0.0
        %629 = vmatprep.subr.mxu0 0.0
        %630 = vmatpush2.xpose.msra.mxu0 0.0
        %631 = vmatprep.subr.mxu0 0.0
        %632 = vmatpush2.xpose.msra.mxu0 0.0
        %633 = vmatprep.subr.mxu0 0.0
        %634 = vmatpush2.xpose.msra.mxu0 0.0
        %635 = vmatprep.subr.mxu0 0.0
        %636 = vmatpush2.xpose.msra.mxu0 0.0
        %637 = vmatprep.subr.mxu0 0.0
        %638 = vmatpush2.xpose.msra.mxu0 0.0
        %639 = vmatprep.subr.mxu0 0.0
        %640 = vmatpush2.xpose.msra.mxu0 0.0
        %641 = vmatprep.subr.mxu0 0.0
        %642 = vmatpush2.xpose.msra.mxu0 0.0
        %643 = vmatprep.subr.mxu0 0.0
        %644 = vmatpush2.xpose.msra.mxu0 0.0
        %645 = vmatprep.subr.mxu0 0.0
        %646 = vmatpush2.xpose.msra.mxu0 0.0
        %647 = vmatprep.mubr.f32.mxu0 0.0
        %648 = vmatmul.mubr.f32.gmra.mxu0 %v579
        %v649 = vpop.f32.mrf.mxu0
        %v650 = vadd.f32 0.0, %v649
        %v651 = vpop.f32.mrf.mxu0
        %652 = vdwg.mxu0
        %654 = vrot.lane.b32.xlu0 %v432, 120
        %v655 = vpop.permute.xlu0 %654
        %v656 = vsel %vm578, %v432, 0
        %v658 = vsel %vm578, %v655, 0
        %660 = vmatprep.subr.mxu0 0.0
        %661 = vmatpush1.xpose.msra.mxu0 0.0
        %662 = vmatprep.subr.mxu0 0.0
        %663 = vmatpush1.xpose.msra.mxu0 0.0
        %664 = vmatprep.subr.mxu0 0.0
        %665 = vmatpush1.xpose.msra.mxu0 0.0
        %666 = vmatprep.subr.mxu0 0.0
        %667 = vmatpush1.xpose.msra.mxu0 0.0
        %668 = vmatprep.subr.mxu0 0.0
        %669 = vmatpush1.xpose.msra.mxu0 0.0
        %670 = vmatprep.subr.mxu0 0.0
        %671 = vmatpush1.xpose.msra.mxu0 0.0
        %672 = vmatprep.subr.mxu0 0.0
        %673 = vmatpush1.xpose.msra.mxu0 0.0
        %674 = vmatprep.subr.mxu0 0.0
        %675 = vmatpush1.xpose.msra.mxu0 0.0
        %676 = vmatprep.subr.mxu0 0.0
        %677 = vmatpush1.xpose.msra.mxu0 0.0
        %678 = vmatprep.subr.mxu0 0.0
        %679 = vmatpush1.xpose.msra.mxu0 0.0
        %680 = vmatprep.subr.mxu0 0.0
        %681 = vmatpush1.xpose.msra.mxu0 0.0
        %682 = vmatprep.subr.mxu0 0.0
        %683 = vmatpush1.xpose.msra.mxu0 0.0
        %684 = vmatprep.subr.mxu0 0.0
        %685 = vmatpush1.xpose.msra.mxu0 0.0
        %686 = vmatprep.subr.mxu0 0.0
        %687 = vmatpush1.xpose.msra.mxu0 0.0
        %688 = vmatprep.subr.mxu0 0.0
        %689 = vmatpush1.xpose.msra.mxu0 0.0
        %690 = vmatprep.subr.mxu0 0.0
        %691 = vmatpush1.xpose.msra.mxu0 %v658
        %692 = vmatprep.subr.mxu0 0.0
        %693 = vmatpush2.xpose.msra.mxu0 0.0
        %694 = vmatprep.subr.mxu0 0.0
        %695 = vmatpush2.xpose.msra.mxu0 0.0
        %696 = vmatprep.subr.mxu0 0.0
        %697 = vmatpush2.xpose.msra.mxu0 0.0
        %698 = vmatprep.subr.mxu0 0.0
        %699 = vmatpush2.xpose.msra.mxu0 0.0
        %700 = vmatprep.subr.mxu0 0.0
        %701 = vmatpush2.xpose.msra.mxu0 0.0
        %702 = vmatprep.subr.mxu0 0.0
        %703 = vmatpush2.xpose.msra.mxu0 0.0
        %704 = vmatprep.subr.mxu0 0.0
        %705 = vmatpush2.xpose.msra.mxu0 0.0
        %706 = vmatprep.subr.mxu0 0.0
        %707 = vmatpush2.xpose.msra.mxu0 0.0
        %708 = vmatprep.subr.mxu0 0.0
        %709 = vmatpush2.xpose.msra.mxu0 0.0
        %710 = vmatprep.subr.mxu0 0.0
        %711 = vmatpush2.xpose.msra.mxu0 0.0
        %712 = vmatprep.subr.mxu0 0.0
        %713 = vmatpush2.xpose.msra.mxu0 0.0
        %714 = vmatprep.subr.mxu0 0.0
        %715 = vmatpush2.xpose.msra.mxu0 0.0
        %716 = vmatprep.subr.mxu0 0.0
        %717 = vmatpush2.xpose.msra.mxu0 0.0
        %718 = vmatprep.subr.mxu0 0.0
        %719 = vmatpush2.xpose.msra.mxu0 0.0
        %720 = vmatprep.subr.mxu0 0.0
        %721 = vmatpush2.xpose.msra.mxu0 0.0
        %722 = vmatprep.subr.mxu0 0.0
        %723 = vmatpush2.xpose.msra.mxu0 0.0
        %724 = vmatprep.mubr.f32.mxu0 0.0
        %725 = vmatmul.mubr.f32.gmra.mxu0 %v656
        %v726 = vpop.f32.mrf.mxu0
        %v727 = vadd.f32 0.0, %v726
        %v728 = vpop.f32.mrf.mxu0
        %729 = vdwg.mxu0
        %731 = vrot.lane.b32.xlu0 %v502, 120
        %v732 = vpop.permute.xlu0 %731
        %v733 = vsel %vm578, %v502, 0
        %v735 = vsel %vm578, %v732, 0
        %737 = vmatprep.subr.mxu0 0.0
        %738 = vmatpush1.xpose.msra.mxu0 0.0
        %739 = vmatprep.subr.mxu0 0.0
        %740 = vmatpush1.xpose.msra.mxu0 0.0
        %741 = vmatprep.subr.mxu0 0.0
        %742 = vmatpush1.xpose.msra.mxu0 0.0
        %743 = vmatprep.subr.mxu0 0.0
        %744 = vmatpush1.xpose.msra.mxu0 0.0
        %745 = vmatprep.subr.mxu0 0.0
        %746 = vmatpush1.xpose.msra.mxu0 0.0
        %747 = vmatprep.subr.mxu0 0.0
        %748 = vmatpush1.xpose.msra.mxu0 0.0
        %749 = vmatprep.subr.mxu0 0.0
        %750 = vmatpush1.xpose.msra.mxu0 0.0
        %751 = vmatprep.subr.mxu0 0.0
        %752 = vmatpush1.xpose.msra.mxu0 0.0
        %753 = vmatprep.subr.mxu0 0.0
        %754 = vmatpush1.xpose.msra.mxu0 0.0
        %755 = vmatprep.subr.mxu0 0.0
        %756 = vmatpush1.xpose.msra.mxu0 0.0
        %757 = vmatprep.subr.mxu0 0.0
        %758 = vmatpush1.xpose.msra.mxu0 0.0
        %759 = vmatprep.subr.mxu0 0.0
        %760 = vmatpush1.xpose.msra.mxu0 0.0
        %761 = vmatprep.subr.mxu0 0.0
        %762 = vmatpush1.xpose.msra.mxu0 0.0
        %763 = vmatprep.subr.mxu0 0.0
        %764 = vmatpush1.xpose.msra.mxu0 0.0
        %765 = vmatprep.subr.mxu0 0.0
        %766 = vmatpush1.xpose.msra.mxu0 0.0
        %767 = vmatprep.subr.mxu0 0.0
        %768 = vmatpush1.xpose.msra.mxu0 %v735
        %769 = vmatprep.subr.mxu0 0.0
        %770 = vmatpush2.xpose.msra.mxu0 0.0
        %771 = vmatprep.subr.mxu0 0.0
        %772 = vmatpush2.xpose.msra.mxu0 0.0
        %773 = vmatprep.subr.mxu0 0.0
        %774 = vmatpush2.xpose.msra.mxu0 0.0
        %775 = vmatprep.subr.mxu0 0.0
        %776 = vmatpush2.xpose.msra.mxu0 0.0
        %777 = vmatprep.subr.mxu0 0.0
        %778 = vmatpush2.xpose.msra.mxu0 0.0
        %779 = vmatprep.subr.mxu0 0.0
        %780 = vmatpush2.xpose.msra.mxu0 0.0
        %781 = vmatprep.subr.mxu0 0.0
        %782 = vmatpush2.xpose.msra.mxu0 0.0
        %783 = vmatprep.subr.mxu0 0.0
        %784 = vmatpush2.xpose.msra.mxu0 0.0
        %785 = vmatprep.subr.mxu0 0.0
        %786 = vmatpush2.xpose.msra.mxu0 0.0
        %787 = vmatprep.subr.mxu0 0.0
        %788 = vmatpush2.xpose.msra.mxu0 0.0
        %789 = vmatprep.subr.mxu0 0.0
        %790 = vmatpush2.xpose.msra.mxu0 0.0
        %791 = vmatprep.subr.mxu0 0.0
        %792 = vmatpush2.xpose.msra.mxu0 0.0
        %793 = vmatprep.subr.mxu0 0.0
        %794 = vmatpush2.xpose.msra.mxu0 0.0
        %795 = vmatprep.subr.mxu0 0.0
        %796 = vmatpush2.xpose.msra.mxu0 0.0
        %797 = vmatprep.subr.mxu0 0.0
        %798 = vmatpush2.xpose.msra.mxu0 0.0
        %799 = vmatprep.subr.mxu0 0.0
        %800 = vmatpush2.xpose.msra.mxu0 0.0
        %801 = vmatprep.mubr.f32.mxu0 0.0
        %802 = vmatmul.mubr.f32.gmra.mxu0 %v733
        %v803 = vpop.f32.mrf.mxu0
        %v804 = vadd.f32 0.0, %v803
        %v805 = vpop.f32.mrf.mxu0
        %806 = vdwg.mxu0
        %808 = vrot.lane.b32.xlu0 %v572, 120
        %v809 = vpop.permute.xlu0 %808
        %v810 = vsel %vm578, %v572, 0
        %v812 = vsel %vm578, %v809, 0
        %814 = vmatprep.subr.mxu0 0.0
        %815 = vmatpush1.xpose.msra.mxu0 0.0
        %816 = vmatprep.subr.mxu0 0.0
        %817 = vmatpush1.xpose.msra.mxu0 0.0
        %818 = vmatprep.subr.mxu0 0.0
        %819 = vmatpush1.xpose.msra.mxu0 0.0
        %820 = vmatprep.subr.mxu0 0.0
        %821 = vmatpush1.xpose.msra.mxu0 0.0
        %822 = vmatprep.subr.mxu0 0.0
        %823 = vmatpush1.xpose.msra.mxu0 0.0
        %824 = vmatprep.subr.mxu0 0.0
        %825 = vmatpush1.xpose.msra.mxu0 0.0
        %826 = vmatprep.subr.mxu0 0.0
        %827 = vmatpush1.xpose.msra.mxu0 0.0
        %828 = vmatprep.subr.mxu0 0.0
        %829 = vmatpush1.xpose.msra.mxu0 0.0
        %830 = vmatprep.subr.mxu0 0.0
        %831 = vmatpush1.xpose.msra.mxu0 0.0
        %832 = vmatprep.subr.mxu0 0.0
        %833 = vmatpush1.xpose.msra.mxu0 0.0
        %834 = vmatprep.subr.mxu0 0.0
        %835 = vmatpush1.xpose.msra.mxu0 0.0
        %836 = vmatprep.subr.mxu0 0.0
        %837 = vmatpush1.xpose.msra.mxu0 0.0
        %838 = vmatprep.subr.mxu0 0.0
        %839 = vmatpush1.xpose.msra.mxu0 0.0
        %840 = vmatprep.subr.mxu0 0.0
        %841 = vmatpush1.xpose.msra.mxu0 0.0
        %842 = vmatprep.subr.mxu0 0.0
        %843 = vmatpush1.xpose.msra.mxu0 0.0
        %844 = vmatprep.subr.mxu0 0.0
        %845 = vmatpush1.xpose.msra.mxu0 %v812
        %846 = vmatprep.subr.mxu0 0.0
        %847 = vmatpush2.xpose.msra.mxu0 0.0
        %848 = vmatprep.subr.mxu0 0.0
        %849 = vmatpush2.xpose.msra.mxu0 0.0
        %850 = vmatprep.subr.mxu0 0.0
        %851 = vmatpush2.xpose.msra.mxu0 0.0
        %852 = vmatprep.subr.mxu0 0.0
        %853 = vmatpush2.xpose.msra.mxu0 0.0
        %854 = vmatprep.subr.mxu0 0.0
        %855 = vmatpush2.xpose.msra.mxu0 0.0
        %856 = vmatprep.subr.mxu0 0.0
        %857 = vmatpush2.xpose.msra.mxu0 0.0
        %858 = vmatprep.subr.mxu0 0.0
        %859 = vmatpush2.xpose.msra.mxu0 0.0
        %860 = vmatprep.subr.mxu0 0.0
        %861 = vmatpush2.xpose.msra.mxu0 0.0
        %862 = vmatprep.subr.mxu0 0.0
        %863 = vmatpush2.xpose.msra.mxu0 0.0
        %864 = vmatprep.subr.mxu0 0.0
        %865 = vmatpush2.xpose.msra.mxu0 0.0
        %866 = vmatprep.subr.mxu0 0.0
        %867 = vmatpush2.xpose.msra.mxu0 0.0
        %868 = vmatprep.subr.mxu0 0.0
        %869 = vmatpush2.xpose.msra.mxu0 0.0
        %870 = vmatprep.subr.mxu0 0.0
        %871 = vmatpush2.xpose.msra.mxu0 0.0
        %872 = vmatprep.subr.mxu0 0.0
        %873 = vmatpush2.xpose.msra.mxu0 0.0
        %874 = vmatprep.subr.mxu0 0.0
        %875 = vmatpush2.xpose.msra.mxu0 0.0
        %876 = vmatprep.subr.mxu0 0.0
        %877 = vmatpush2.xpose.msra.mxu0 0.0
        %878 = vmatprep.mubr.f32.mxu0 0.0
        %879 = vmatmul.mubr.f32.gmra.mxu0 %v810
        %v880 = vpop.f32.mrf.mxu0
        %v881 = vadd.f32 0.0, %v880
        %v882 = vpop.f32.mrf.mxu0
        %883 = vdwg.mxu0
        %v884 = vsel %vm578, %v650, -inf
        %885 = vmax.xlane.f32.xlu0 %v884
        %v886 = vpop.xlane.xlu0 %885
        %v887 = vsel %vm578, %v727, -inf
        %888 = vmax.xlane.f32.xlu0 %v887
        %v889 = vpop.xlane.xlu0 %888
        %v890 = vsel %vm578, %v804, -inf
        %891 = vmax.xlane.f32.xlu0 %v890
        %v892 = vpop.xlane.xlu0 %891
        %v893 = vsel %vm578, %v881, -inf
        %894 = vmax.xlane.f32.xlu0 %v893
        %v895 = vpop.xlane.xlu0 %894
        %v896 = vsub.f32 %v650, %v886
        %v897 = vsub.f32 %v727, %v889
        %v898 = vsub.f32 %v804, %v892
        %v899 = vsub.f32 %v881, %v895
        %v900 = vmul.f32 %v896, 1.442695
        %v901 = vpow.pop %v900
        %v902 = vmul.f32 %v897, 1.442695
        %v903 = vpow.pop %v902
        %v904 = vmul.f32 %v898, 1.442695
        %v905 = vpow.pop %v904
        %v906 = vmul.f32 %v899, 1.442695
        %v907 = vpow.pop %v906
        %v908 = vsel %vm578, %v901, 0.0
        %909 = vadd.xlane.f32.xlu0 %v908
        %v910 = vpop.xlane.xlu0 %909
        %v911 = vsel %vm578, %v903, 0.0
        %912 = vadd.xlane.f32.xlu0 %v911
        %v913 = vpop.xlane.xlu0 %912
        %v914 = vsel %vm578, %v905, 0.0
        %915 = vadd.xlane.f32.xlu0 %v914
        %v916 = vpop.xlane.xlu0 %915
        %v917 = vsel %vm578, %v907, 0.0
        %918 = vadd.xlane.f32.xlu0 %v917
        %v919 = vpop.xlane.xlu0 %918
        %920 = vrot.lane.b32.xlu0 %v362, 112
        %v921 = vpop.permute.xlu0 %920
        %v924 = vsel %vm578, %v901, 0
        %926 = vmatprep.subr.mxu0 0.0
        %927 = vmatpush1.msra.mxu0 0.0
        %928 = vmatprep.subr.mxu0 0.0
        %929 = vmatpush1.msra.mxu0 0.0
        %930 = vmatprep.subr.mxu0 0.0
        %931 = vmatpush1.msra.mxu0 0.0
        %932 = vmatprep.subr.mxu0 0.0
        %933 = vmatpush1.msra.mxu0 0.0
        %934 = vmatprep.subr.mxu0 0.0
        %935 = vmatpush1.msra.mxu0 0.0
        %936 = vmatprep.subr.mxu0 0.0
        %937 = vmatpush1.msra.mxu0 0.0
        %938 = vmatprep.subr.mxu0 0.0
        %939 = vmatpush1.msra.mxu0 0.0
        %940 = vmatprep.subr.mxu0 0.0
        %941 = vmatpush1.msra.mxu0 0.0
        %942 = vmatprep.subr.mxu0 0.0
        %943 = vmatpush1.msra.mxu0 0.0
        %944 = vmatprep.subr.mxu0 0.0
        %945 = vmatpush1.msra.mxu0 0.0
        %946 = vmatprep.subr.mxu0 0.0
        %947 = vmatpush1.msra.mxu0 0.0
        %948 = vmatprep.subr.mxu0 0.0
        %949 = vmatpush1.msra.mxu0 0.0
        %950 = vmatprep.subr.mxu0 0.0
        %951 = vmatpush1.msra.mxu0 0.0
        %952 = vmatprep.subr.mxu0 0.0
        %953 = vmatpush1.msra.mxu0 0.0
        %954 = vmatprep.subr.mxu0 0.0
        %955 = vmatpush1.msra.mxu0 0.0
        %956 = vmatprep.subr.mxu0 0.0
        %957 = vmatpush1.msra.mxu0 %v921
        %958 = vmatprep.subr.mxu0 0.0
        %959 = vmatpush2.msra.mxu0 0.0
        %960 = vmatprep.subr.mxu0 0.0
        %961 = vmatpush2.msra.mxu0 0.0
        %962 = vmatprep.subr.mxu0 0.0
        %963 = vmatpush2.msra.mxu0 0.0
        %964 = vmatprep.subr.mxu0 0.0
        %965 = vmatpush2.msra.mxu0 0.0
        %966 = vmatprep.subr.mxu0 0.0
        %967 = vmatpush2.msra.mxu0 0.0
        %968 = vmatprep.subr.mxu0 0.0
        %969 = vmatpush2.msra.mxu0 0.0
        %970 = vmatprep.subr.mxu0 0.0
        %971 = vmatpush2.msra.mxu0 0.0
        %972 = vmatprep.subr.mxu0 0.0
        %973 = vmatpush2.msra.mxu0 0.0
        %974 = vmatprep.subr.mxu0 0.0
        %975 = vmatpush2.msra.mxu0 0.0
        %976 = vmatprep.subr.mxu0 0.0
        %977 = vmatpush2.msra.mxu0 0.0
        %978 = vmatprep.subr.mxu0 0.0
        %979 = vmatpush2.msra.mxu0 0.0
        %980 = vmatprep.subr.mxu0 0.0
        %981 = vmatpush2.msra.mxu0 0.0
        %982 = vmatprep.subr.mxu0 0.0
        %983 = vmatpush2.msra.mxu0 0.0
        %984 = vmatprep.subr.mxu0 0.0
        %985 = vmatpush2.msra.mxu0 0.0
        %986 = vmatprep.subr.mxu0 0.0
        %987 = vmatpush2.msra.mxu0 0.0
        %988 = vmatprep.subr.mxu0 0.0
        %989 = vmatpush2.msra.mxu0 0.0
        %990 = vmatprep.mubr.f32.mxu0 0.0
        %991 = vmatmul.mubr.f32.gmra.mxu0 %v924
        %v992 = vpop.f32.mrf.mxu0
        %v993 = vadd.f32 0.0, %v992
        %v994 = vpop.f32.mrf.mxu0
        %995 = vdwg.mxu0
        %996 = vrot.lane.b32.xlu0 %v432, 112
        %v997 = vpop.permute.xlu0 %996
        %v1000 = vsel %vm578, %v903, 0
        %1002 = vmatprep.subr.mxu0 0.0
        %1003 = vmatpush1.msra.mxu0 0.0
        %1004 = vmatprep.subr.mxu0 0.0
        %1005 = vmatpush1.msra.mxu0 0.0
        %1006 = vmatprep.subr.mxu0 0.0
        %1007 = vmatpush1.msra.mxu0 0.0
        %1008 = vmatprep.subr.mxu0 0.0
        %1009 = vmatpush1.msra.mxu0 0.0
        %1010 = vmatprep.subr.mxu0 0.0
        %1011 = vmatpush1.msra.mxu0 0.0
        %1012 = vmatprep.subr.mxu0 0.0
        %1013 = vmatpush1.msra.mxu0 0.0
        %1014 = vmatprep.subr.mxu0 0.0
        %1015 = vmatpush1.msra.mxu0 0.0
        %1016 = vmatprep.subr.mxu0 0.0
        %1017 = vmatpush1.msra.mxu0 0.0
        %1018 = vmatprep.subr.mxu0 0.0
        %1019 = vmatpush1.msra.mxu0 0.0
        %1020 = vmatprep.subr.mxu0 0.0
        %1021 = vmatpush1.msra.mxu0 0.0
        %1022 = vmatprep.subr.mxu0 0.0
        %1023 = vmatpush1.msra.mxu0 0.0
        %1024 = vmatprep.subr.mxu0 0.0
        %1025 = vmatpush1.msra.mxu0 0.0
        %1026 = vmatprep.subr.mxu0 0.0
        %1027 = vmatpush1.msra.mxu0 0.0
        %1028 = vmatprep.subr.mxu0 0.0
        %1029 = vmatpush1.msra.mxu0 0.0
        %1030 = vmatprep.subr.mxu0 0.0
        %1031 = vmatpush1.msra.mxu0 0.0
        %1032 = vmatprep.subr.mxu0 0.0
        %1033 = vmatpush1.msra.mxu0 %v997
        %1034 = vmatprep.subr.mxu0 0.0
        %1035 = vmatpush2.msra.mxu0 0.0
        %1036 = vmatprep.subr.mxu0 0.0
        %1037 = vmatpush2.msra.mxu0 0.0
        %1038 = vmatprep.subr.mxu0 0.0
        %1039 = vmatpush2.msra.mxu0 0.0
        %1040 = vmatprep.subr.mxu0 0.0
        %1041 = vmatpush2.msra.mxu0 0.0
        %1042 = vmatprep.subr.mxu0 0.0
        %1043 = vmatpush2.msra.mxu0 0.0
        %1044 = vmatprep.subr.mxu0 0.0
        %1045 = vmatpush2.msra.mxu0 0.0
        %1046 = vmatprep.subr.mxu0 0.0
        %1047 = vmatpush2.msra.mxu0 0.0
        %1048 = vmatprep.subr.mxu0 0.0
        %1049 = vmatpush2.msra.mxu0 0.0
        %1050 = vmatprep.subr.mxu0 0.0
        %1051 = vmatpush2.msra.mxu0 0.0
        %1052 = vmatprep.subr.mxu0 0.0
        %1053 = vmatpush2.msra.mxu0 0.0
        %1054 = vmatprep.subr.mxu0 0.0
        %1055 = vmatpush2.msra.mxu0 0.0
        %1056 = vmatprep.subr.mxu0 0.0
        %1057 = vmatpush2.msra.mxu0 0.0
        %1058 = vmatprep.subr.mxu0 0.0
        %1059 = vmatpush2.msra.mxu0 0.0
        %1060 = vmatprep.subr.mxu0 0.0
        %1061 = vmatpush2.msra.mxu0 0.0
        %1062 = vmatprep.subr.mxu0 0.0
        %1063 = vmatpush2.msra.mxu0 0.0
        %1064 = vmatprep.subr.mxu0 0.0
        %1065 = vmatpush2.msra.mxu0 0.0
        %1066 = vmatprep.mubr.f32.mxu0 0.0
        %1067 = vmatmul.mubr.f32.gmra.mxu0 %v1000
        %v1068 = vpop.f32.mrf.mxu0
        %v1069 = vadd.f32 0.0, %v1068
        %v1070 = vpop.f32.mrf.mxu0
        %1071 = vdwg.mxu0
        %1072 = vrot.lane.b32.xlu0 %v502, 112
        %v1073 = vpop.permute.xlu0 %1072
        %v1076 = vsel %vm578, %v905, 0
        %1078 = vmatprep.subr.mxu0 0.0
        %1079 = vmatpush1.msra.mxu0 0.0
        %1080 = vmatprep.subr.mxu0 0.0
        %1081 = vmatpush1.msra.mxu0 0.0
        %1082 = vmatprep.subr.mxu0 0.0
        %1083 = vmatpush1.msra.mxu0 0.0
        %1084 = vmatprep.subr.mxu0 0.0
        %1085 = vmatpush1.msra.mxu0 0.0
        %1086 = vmatprep.subr.mxu0 0.0
        %1087 = vmatpush1.msra.mxu0 0.0
        %1088 = vmatprep.subr.mxu0 0.0
        %1089 = vmatpush1.msra.mxu0 0.0
        %1090 = vmatprep.subr.mxu0 0.0
        %1091 = vmatpush1.msra.mxu0 0.0
        %1092 = vmatprep.subr.mxu0 0.0
        %1093 = vmatpush1.msra.mxu0 0.0
        %1094 = vmatprep.subr.mxu0 0.0
        %1095 = vmatpush1.msra.mxu0 0.0
        %1096 = vmatprep.subr.mxu0 0.0
        %1097 = vmatpush1.msra.mxu0 0.0
        %1098 = vmatprep.subr.mxu0 0.0
        %1099 = vmatpush1.msra.mxu0 0.0
        %1100 = vmatprep.subr.mxu0 0.0
        %1101 = vmatpush1.msra.mxu0 0.0
        %1102 = vmatprep.subr.mxu0 0.0
        %1103 = vmatpush1.msra.mxu0 0.0
        %1104 = vmatprep.subr.mxu0 0.0
        %1105 = vmatpush1.msra.mxu0 0.0
        %1106 = vmatprep.subr.mxu0 0.0
        %1107 = vmatpush1.msra.mxu0 0.0
        %1108 = vmatprep.subr.mxu0 0.0
        %1109 = vmatpush1.msra.mxu0 %v1073
        %1110 = vmatprep.subr.mxu0 0.0
        %1111 = vmatpush2.msra.mxu0 0.0
        %1112 = vmatprep.subr.mxu0 0.0
        %1113 = vmatpush2.msra.mxu0 0.0
        %1114 = vmatprep.subr.mxu0 0.0
        %1115 = vmatpush2.msra.mxu0 0.0
        %1116 = vmatprep.subr.mxu0 0.0
        %1117 = vmatpush2.msra.mxu0 0.0
        %1118 = vmatprep.subr.mxu0 0.0
        %1119 = vmatpush2.msra.mxu0 0.0
        %1120 = vmatprep.subr.mxu0 0.0
        %1121 = vmatpush2.msra.mxu0 0.0
        %1122 = vmatprep.subr.mxu0 0.0
        %1123 = vmatpush2.msra.mxu0 0.0
        %1124 = vmatprep.subr.mxu0 0.0
        %1125 = vmatpush2.msra.mxu0 0.0
        %1126 = vmatprep.subr.mxu0 0.0
        %1127 = vmatpush2.msra.mxu0 0.0
        %1128 = vmatprep.subr.mxu0 0.0
        %1129 = vmatpush2.msra.mxu0 0.0
        %1130 = vmatprep.subr.mxu0 0.0
        %1131 = vmatpush2.msra.mxu0 0.0
        %1132 = vmatprep.subr.mxu0 0.0
        %1133 = vmatpush2.msra.mxu0 0.0
        %1134 = vmatprep.subr.mxu0 0.0
        %1135 = vmatpush2.msra.mxu0 0.0
        %1136 = vmatprep.subr.mxu0 0.0
        %1137 = vmatpush2.msra.mxu0 0.0
        %1138 = vmatprep.subr.mxu0 0.0
        %1139 = vmatpush2.msra.mxu0 0.0
        %1140 = vmatprep.subr.mxu0 0.0
        %1141 = vmatpush2.msra.mxu0 0.0
        %1142 = vmatprep.mubr.f32.mxu0 0.0
        %1143 = vmatmul.mubr.f32.gmra.mxu0 %v1076
        %v1144 = vpop.f32.mrf.mxu0
        %v1145 = vadd.f32 0.0, %v1144
        %v1146 = vpop.f32.mrf.mxu0
        %1147 = vdwg.mxu0
        %1148 = vrot.lane.b32.xlu0 %v572, 112
        %v1149 = vpop.permute.xlu0 %1148
        %v1152 = vsel %vm578, %v907, 0
        %1154 = vmatprep.subr.mxu0 0.0
        %1155 = vmatpush1.msra.mxu0 0.0
        %1156 = vmatprep.subr.mxu0 0.0
        %1157 = vmatpush1.msra.mxu0 0.0
        %1158 = vmatprep.subr.mxu0 0.0
        %1159 = vmatpush1.msra.mxu0 0.0
        %1160 = vmatprep.subr.mxu0 0.0
        %1161 = vmatpush1.msra.mxu0 0.0
        %1162 = vmatprep.subr.mxu0 0.0
        %1163 = vmatpush1.msra.mxu0 0.0
        %1164 = vmatprep.subr.mxu0 0.0
        %1165 = vmatpush1.msra.mxu0 0.0
        %1166 = vmatprep.subr.mxu0 0.0
        %1167 = vmatpush1.msra.mxu0 0.0
        %1168 = vmatprep.subr.mxu0 0.0
        %1169 = vmatpush1.msra.mxu0 0.0
        %1170 = vmatprep.subr.mxu0 0.0
        %1171 = vmatpush1.msra.mxu0 0.0
        %1172 = vmatprep.subr.mxu0 0.0
        %1173 = vmatpush1.msra.mxu0 0.0
        %1174 = vmatprep.subr.mxu0 0.0
        %1175 = vmatpush1.msra.mxu0 0.0
        %1176 = vmatprep.subr.mxu0 0.0
        %1177 = vmatpush1.msra.mxu0 0.0
        %1178 = vmatprep.subr.mxu0 0.0
        %1179 = vmatpush1.msra.mxu0 0.0
        %1180 = vmatprep.subr.mxu0 0.0
        %1181 = vmatpush1.msra.mxu0 0.0
        %1182 = vmatprep.subr.mxu0 0.0
        %1183 = vmatpush1.msra.mxu0 0.0
        %1184 = vmatprep.subr.mxu0 0.0
        %1185 = vmatpush1.msra.mxu0 %v1149
        %1186 = vmatprep.subr.mxu0 0.0
        %1187 = vmatpush2.msra.mxu0 0.0
        %1188 = vmatprep.subr.mxu0 0.0
        %1189 = vmatpush2.msra.mxu0 0.0
        %1190 = vmatprep.subr.mxu0 0.0
        %1191 = vmatpush2.msra.mxu0 0.0
        %1192 = vmatprep.subr.mxu0 0.0
        %1193 = vmatpush2.msra.mxu0 0.0
        %1194 = vmatprep.subr.mxu0 0.0
        %1195 = vmatpush2.msra.mxu0 0.0
        %1196 = vmatprep.subr.mxu0 0.0
        %1197 = vmatpush2.msra.mxu0 0.0
        %1198 = vmatprep.subr.mxu0 0.0
        %1199 = vmatpush2.msra.mxu0 0.0
        %1200 = vmatprep.subr.mxu0 0.0
        %1201 = vmatpush2.msra.mxu0 0.0
        %1202 = vmatprep.subr.mxu0 0.0
        %1203 = vmatpush2.msra.mxu0 0.0
        %1204 = vmatprep.subr.mxu0 0.0
        %1205 = vmatpush2.msra.mxu0 0.0
        %1206 = vmatprep.subr.mxu0 0.0
        %1207 = vmatpush2.msra.mxu0 0.0
        %1208 = vmatprep.subr.mxu0 0.0
        %1209 = vmatpush2.msra.mxu0 0.0
        %1210 = vmatprep.subr.mxu0 0.0
        %1211 = vmatpush2.msra.mxu0 0.0
        %1212 = vmatprep.subr.mxu0 0.0
        %1213 = vmatpush2.msra.mxu0 0.0
        %1214 = vmatprep.subr.mxu0 0.0
        %1215 = vmatpush2.msra.mxu0 0.0
        %1216 = vmatprep.subr.mxu0 0.0
        %1217 = vmatpush2.msra.mxu0 0.0
        %1218 = vmatprep.mubr.f32.mxu0 0.0
        %1219 = vmatmul.mubr.f32.gmra.mxu0 %v1152
        %v1220 = vpop.f32.mrf.mxu0
        %v1221 = vadd.f32 0.0, %v1220
        %v1222 = vpop.f32.mrf.mxu0
        %1223 = vdwg.mxu0
        %vm1224 = vcmask 195712
        %v1225 = vsel %vm1224, %v362, 0.0
        %v1226 = vrot.slane %v1225, 4
        %v1227 = vadd.f32 %v1225, %v1226
        %v1228 = vrot.slane %v1227, 2
        %v1229 = vadd.f32 %v1227, %v1228
        %v1230 = vrot.slane %v1229, 1
        %v1231 = vadd.f32 %v1229, %v1230
        %v1232 = vsel %vm1224, %v432, 0.0
        %v1233 = vrot.slane %v1232, 4
        %v1234 = vadd.f32 %v1232, %v1233
        %v1235 = vrot.slane %v1234, 2
        %v1236 = vadd.f32 %v1234, %v1235
        %v1237 = vrot.slane %v1236, 1
        %v1238 = vadd.f32 %v1236, %v1237
        %v1239 = vsel %vm1224, %v502, 0.0
        %v1240 = vrot.slane %v1239, 4
        %v1241 = vadd.f32 %v1239, %v1240
        %v1242 = vrot.slane %v1241, 2
        %v1243 = vadd.f32 %v1241, %v1242
        %v1244 = vrot.slane %v1243, 1
        %v1245 = vadd.f32 %v1243, %v1244
        %v1246 = vsel %vm1224, %v572, 0.0
        %v1247 = vrot.slane %v1246, 4
        %v1248 = vadd.f32 %v1246, %v1247
        %v1249 = vrot.slane %v1248, 2
        %v1250 = vadd.f32 %v1248, %v1249
        %v1251 = vrot.slane %v1250, 1
        %v1252 = vadd.f32 %v1250, %v1251
        %v1253 = vrcp.pop %v910
        %v1254 = vrcp.pop %v913
        %v1255 = vrcp.pop %v916
        %v1256 = vrcp.pop %v919
        %v1257 = vmul.f32 %v1253, 0.7
        %v1258 = vmul.f32 %v1254, 0.7
        %v1259 = vmul.f32 %v1255, 0.7
        %v1260 = vmul.f32 %v1256, 0.7
        %v1261 = vmul.f32 %v1257, %v993
        %v1262 = vmul.f32 %v1258, %v1069
        %v1263 = vmul.f32 %v1259, %v1145
        %v1264 = vmul.f32 %v1260, %v1221
        %v1265 = vmul.f32 %v1231, 0.3
        %v1266 = vmul.f32 %v1238, 0.3
        %v1267 = vmul.f32 %v1245, 0.3
        %v1268 = vmul.f32 %v1252, 0.3
        %1273 = vrot.lane.b32.xlu0 %v1265, 112
        %v1274 = vpop.permute.xlu0 %1273
        %1275 = vrot.lane.b32.xlu0 %v1266, 112
        %v1276 = vpop.permute.xlu0 %1275
        %1277 = vrot.lane.b32.xlu0 %v1267, 112
        %v1278 = vpop.permute.xlu0 %1277
        %1279 = vrot.lane.b32.xlu0 %v1268, 112
        %v1280 = vpop.permute.xlu0 %1279
        %v1285 = vadd.f32 %v1261, %v1274
        %v1286 = vadd.f32 %v1262, %v1276
        %v1287 = vadd.f32 %v1263, %v1278
        %v1288 = vadd.f32 %v1264, %v1280
        %v1289 = vld [vmem:[%s2] sm:$0xff]
        %v1290 = vld [vmem:[%s2 + $0x8] sm:$0xff]
        %v1291 = vld [vmem:[%s2 + $0x10] sm:$0xff]
        %v1292 = vld [vmem:[%s2 + $0x18] sm:$0xff]
        %v1294 = vsel %vm578, %v1286, 0
        %1296 = vmatprep.subr.mxu0 0.0
        %1297 = vmatpush1.msra.mxu0 0.0
        %1298 = vmatprep.subr.mxu0 0.0
        %1299 = vmatpush1.msra.mxu0 0.0
        %1300 = vmatprep.subr.mxu0 0.0
        %1301 = vmatpush1.msra.mxu0 0.0
        %1302 = vmatprep.subr.mxu0 0.0
        %1303 = vmatpush1.msra.mxu0 0.0
        %1304 = vmatprep.subr.mxu0 0.0
        %1305 = vmatpush1.msra.mxu0 0.0
        %1306 = vmatprep.subr.mxu0 0.0
        %1307 = vmatpush1.msra.mxu0 0.0
        %1308 = vmatprep.subr.mxu0 0.0
        %1309 = vmatpush1.msra.mxu0 0.0
        %1310 = vmatprep.subr.mxu0 0.0
        %1311 = vmatpush1.msra.mxu0 0.0
        %1312 = vmatprep.subr.mxu0 0.0
        %1313 = vmatpush1.msra.mxu0 0.0
        %1314 = vmatprep.subr.mxu0 0.0
        %1315 = vmatpush1.msra.mxu0 0.0
        %1316 = vmatprep.subr.mxu0 0.0
        %1317 = vmatpush1.msra.mxu0 0.0
        %1318 = vmatprep.subr.mxu0 0.0
        %1319 = vmatpush1.msra.mxu0 0.0
        %1320 = vmatprep.subr.mxu0 0.0
        %1321 = vmatpush1.msra.mxu0 0.0
        %1322 = vmatprep.subr.mxu0 0.0
        %1323 = vmatpush1.msra.mxu0 0.0
        %1324 = vmatprep.subr.mxu0 0.0
        %1325 = vmatpush1.msra.mxu0 0.0
        %1326 = vmatprep.subr.mxu0 0.0
        %1327 = vmatpush1.msra.mxu0 %v1290
        %1328 = vmatprep.subr.mxu0 0.0
        %1329 = vmatpush2.msra.mxu0 0.0
        %1330 = vmatprep.subr.mxu0 0.0
        %1331 = vmatpush2.msra.mxu0 0.0
        %1332 = vmatprep.subr.mxu0 0.0
        %1333 = vmatpush2.msra.mxu0 0.0
        %1334 = vmatprep.subr.mxu0 0.0
        %1335 = vmatpush2.msra.mxu0 0.0
        %1336 = vmatprep.subr.mxu0 0.0
        %1337 = vmatpush2.msra.mxu0 0.0
        %1338 = vmatprep.subr.mxu0 0.0
        %1339 = vmatpush2.msra.mxu0 0.0
        %1340 = vmatprep.subr.mxu0 0.0
        %1341 = vmatpush2.msra.mxu0 0.0
        %1342 = vmatprep.subr.mxu0 0.0
        %1343 = vmatpush2.msra.mxu0 0.0
        %1344 = vmatprep.subr.mxu0 0.0
        %1345 = vmatpush2.msra.mxu0 0.0
        %1346 = vmatprep.subr.mxu0 0.0
        %1347 = vmatpush2.msra.mxu0 0.0
        %1348 = vmatprep.subr.mxu0 0.0
        %1349 = vmatpush2.msra.mxu0 0.0
        %1350 = vmatprep.subr.mxu0 0.0
        %1351 = vmatpush2.msra.mxu0 0.0
        %1352 = vmatprep.subr.mxu0 0.0
        %1353 = vmatpush2.msra.mxu0 0.0
        %1354 = vmatprep.subr.mxu0 0.0
        %1355 = vmatpush2.msra.mxu0 0.0
        %1356 = vmatprep.subr.mxu0 0.0
        %1357 = vmatpush2.msra.mxu0 0.0
        %1358 = vmatprep.subr.mxu0 0.0
        %1359 = vmatpush2.msra.mxu0 0.0
        %1360 = vmatprep.mubr.f32.mxu0 0.0
        %1361 = vmatmul.mubr.f32.gmra.mxu0 %v1294
        %v1362 = vpop.f32.mrf.mxu0
        %v1363 = vadd.f32 0.0, %v1362
        %v1364 = vpop.f32.mrf.mxu0
        %1365 = vdwg.mxu0
        %v1367 = vsel %vm578, %v1285, 0
        %1369 = vmatprep.subr.mxu0 0.0
        %1370 = vmatpush1.msra.mxu0 0.0
        %1371 = vmatprep.subr.mxu0 0.0
        %1372 = vmatpush1.msra.mxu0 0.0
        %1373 = vmatprep.subr.mxu0 0.0
        %1374 = vmatpush1.msra.mxu0 0.0
        %1375 = vmatprep.subr.mxu0 0.0
        %1376 = vmatpush1.msra.mxu0 0.0
        %1377 = vmatprep.subr.mxu0 0.0
        %1378 = vmatpush1.msra.mxu0 0.0
        %1379 = vmatprep.subr.mxu0 0.0
        %1380 = vmatpush1.msra.mxu0 0.0
        %1381 = vmatprep.subr.mxu0 0.0
        %1382 = vmatpush1.msra.mxu0 0.0
        %1383 = vmatprep.subr.mxu0 0.0
        %1384 = vmatpush1.msra.mxu0 0.0
        %1385 = vmatprep.subr.mxu0 0.0
        %1386 = vmatpush1.msra.mxu0 0.0
        %1387 = vmatprep.subr.mxu0 0.0
        %1388 = vmatpush1.msra.mxu0 0.0
        %1389 = vmatprep.subr.mxu0 0.0
        %1390 = vmatpush1.msra.mxu0 0.0
        %1391 = vmatprep.subr.mxu0 0.0
        %1392 = vmatpush1.msra.mxu0 0.0
        %1393 = vmatprep.subr.mxu0 0.0
        %1394 = vmatpush1.msra.mxu0 0.0
        %1395 = vmatprep.subr.mxu0 0.0
        %1396 = vmatpush1.msra.mxu0 0.0
        %1397 = vmatprep.subr.mxu0 0.0
        %1398 = vmatpush1.msra.mxu0 0.0
        %1399 = vmatprep.subr.mxu0 0.0
        %1400 = vmatpush1.msra.mxu0 %v1289
        %1401 = vmatprep.subr.mxu0 0.0
        %1402 = vmatpush2.msra.mxu0 0.0
        %1403 = vmatprep.subr.mxu0 0.0
        %1404 = vmatpush2.msra.mxu0 0.0
        %1405 = vmatprep.subr.mxu0 0.0
        %1406 = vmatpush2.msra.mxu0 0.0
        %1407 = vmatprep.subr.mxu0 0.0
        %1408 = vmatpush2.msra.mxu0 0.0
        %1409 = vmatprep.subr.mxu0 0.0
        %1410 = vmatpush2.msra.mxu0 0.0
        %1411 = vmatprep.subr.mxu0 0.0
        %1412 = vmatpush2.msra.mxu0 0.0
        %1413 = vmatprep.subr.mxu0 0.0
        %1414 = vmatpush2.msra.mxu0 0.0
        %1415 = vmatprep.subr.mxu0 0.0
        %1416 = vmatpush2.msra.mxu0 0.0
        %1417 = vmatprep.subr.mxu0 0.0
        %1418 = vmatpush2.msra.mxu0 0.0
        %1419 = vmatprep.subr.mxu0 0.0
        %1420 = vmatpush2.msra.mxu0 0.0
        %1421 = vmatprep.subr.mxu0 0.0
        %1422 = vmatpush2.msra.mxu0 0.0
        %1423 = vmatprep.subr.mxu0 0.0
        %1424 = vmatpush2.msra.mxu0 0.0
        %1425 = vmatprep.subr.mxu0 0.0
        %1426 = vmatpush2.msra.mxu0 0.0
        %1427 = vmatprep.subr.mxu0 0.0
        %1428 = vmatpush2.msra.mxu0 0.0
        %1429 = vmatprep.subr.mxu0 0.0
        %1430 = vmatpush2.msra.mxu0 0.0
        %1431 = vmatprep.subr.mxu0 0.0
        %1432 = vmatpush2.msra.mxu0 0.0
        %1433 = vmatprep.mubr.f32.mxu0 0.0
        %1434 = vmatmul.mubr.f32.gmra.mxu0 %v1367
        %v1435 = vpop.f32.mrf.mxu0
        %v1436 = vadd.f32 %v1363, %v1435
        %v1437 = vpop.f32.mrf.mxu0
        %1438 = vdwg.mxu0
        %v1440 = vsel %vm578, %v1287, 0
        %1442 = vmatprep.subr.mxu0 0.0
        %1443 = vmatpush1.msra.mxu0 0.0
        %1444 = vmatprep.subr.mxu0 0.0
        %1445 = vmatpush1.msra.mxu0 0.0
        %1446 = vmatprep.subr.mxu0 0.0
        %1447 = vmatpush1.msra.mxu0 0.0
        %1448 = vmatprep.subr.mxu0 0.0
        %1449 = vmatpush1.msra.mxu0 0.0
        %1450 = vmatprep.subr.mxu0 0.0
        %1451 = vmatpush1.msra.mxu0 0.0
        %1452 = vmatprep.subr.mxu0 0.0
        %1453 = vmatpush1.msra.mxu0 0.0
        %1454 = vmatprep.subr.mxu0 0.0
        %1455 = vmatpush1.msra.mxu0 0.0
        %1456 = vmatprep.subr.mxu0 0.0
        %1457 = vmatpush1.msra.mxu0 0.0
        %1458 = vmatprep.subr.mxu0 0.0
        %1459 = vmatpush1.msra.mxu0 0.0
        %1460 = vmatprep.subr.mxu0 0.0
        %1461 = vmatpush1.msra.mxu0 0.0
        %1462 = vmatprep.subr.mxu0 0.0
        %1463 = vmatpush1.msra.mxu0 0.0
        %1464 = vmatprep.subr.mxu0 0.0
        %1465 = vmatpush1.msra.mxu0 0.0
        %1466 = vmatprep.subr.mxu0 0.0
        %1467 = vmatpush1.msra.mxu0 0.0
        %1468 = vmatprep.subr.mxu0 0.0
        %1469 = vmatpush1.msra.mxu0 0.0
        %1470 = vmatprep.subr.mxu0 0.0
        %1471 = vmatpush1.msra.mxu0 0.0
        %1472 = vmatprep.subr.mxu0 0.0
        %1473 = vmatpush1.msra.mxu0 %v1291
        %1474 = vmatprep.subr.mxu0 0.0
        %1475 = vmatpush2.msra.mxu0 0.0
        %1476 = vmatprep.subr.mxu0 0.0
        %1477 = vmatpush2.msra.mxu0 0.0
        %1478 = vmatprep.subr.mxu0 0.0
        %1479 = vmatpush2.msra.mxu0 0.0
        %1480 = vmatprep.subr.mxu0 0.0
        %1481 = vmatpush2.msra.mxu0 0.0
        %1482 = vmatprep.subr.mxu0 0.0
        %1483 = vmatpush2.msra.mxu0 0.0
        %1484 = vmatprep.subr.mxu0 0.0
        %1485 = vmatpush2.msra.mxu0 0.0
        %1486 = vmatprep.subr.mxu0 0.0
        %1487 = vmatpush2.msra.mxu0 0.0
        %1488 = vmatprep.subr.mxu0 0.0
        %1489 = vmatpush2.msra.mxu0 0.0
        %1490 = vmatprep.subr.mxu0 0.0
        %1491 = vmatpush2.msra.mxu0 0.0
        %1492 = vmatprep.subr.mxu0 0.0
        %1493 = vmatpush2.msra.mxu0 0.0
        %1494 = vmatprep.subr.mxu0 0.0
        %1495 = vmatpush2.msra.mxu0 0.0
        %1496 = vmatprep.subr.mxu0 0.0
        %1497 = vmatpush2.msra.mxu0 0.0
        %1498 = vmatprep.subr.mxu0 0.0
        %1499 = vmatpush2.msra.mxu0 0.0
        %1500 = vmatprep.subr.mxu0 0.0
        %1501 = vmatpush2.msra.mxu0 0.0
        %1502 = vmatprep.subr.mxu0 0.0
        %1503 = vmatpush2.msra.mxu0 0.0
        %1504 = vmatprep.subr.mxu0 0.0
        %1505 = vmatpush2.msra.mxu0 0.0
        %1506 = vmatprep.mubr.f32.mxu0 0.0
        %1507 = vmatmul.mubr.f32.gmra.mxu0 %v1440
        %v1508 = vpop.f32.mrf.mxu0
        %v1509 = vadd.f32 0.0, %v1508
        %v1510 = vpop.f32.mrf.mxu0
        %1511 = vdwg.mxu0
        %v1512 = vadd.f32 %v1436, %v1509
        %v1514 = vsel %vm578, %v1288, 0
        %1516 = vmatprep.subr.mxu0 0.0
        %1517 = vmatpush1.msra.mxu0 0.0
        %1518 = vmatprep.subr.mxu0 0.0
        %1519 = vmatpush1.msra.mxu0 0.0
        %1520 = vmatprep.subr.mxu0 0.0
        %1521 = vmatpush1.msra.mxu0 0.0
        %1522 = vmatprep.subr.mxu0 0.0
        %1523 = vmatpush1.msra.mxu0 0.0
        %1524 = vmatprep.subr.mxu0 0.0
        %1525 = vmatpush1.msra.mxu0 0.0
        %1526 = vmatprep.subr.mxu0 0.0
        %1527 = vmatpush1.msra.mxu0 0.0
        %1528 = vmatprep.subr.mxu0 0.0
        %1529 = vmatpush1.msra.mxu0 0.0
        %1530 = vmatprep.subr.mxu0 0.0
        %1531 = vmatpush1.msra.mxu0 0.0
        %1532 = vmatprep.subr.mxu0 0.0
        %1533 = vmatpush1.msra.mxu0 0.0
        %1534 = vmatprep.subr.mxu0 0.0
        %1535 = vmatpush1.msra.mxu0 0.0
        %1536 = vmatprep.subr.mxu0 0.0
        %1537 = vmatpush1.msra.mxu0 0.0
        %1538 = vmatprep.subr.mxu0 0.0
        %1539 = vmatpush1.msra.mxu0 0.0
        %1540 = vmatprep.subr.mxu0 0.0
        %1541 = vmatpush1.msra.mxu0 0.0
        %1542 = vmatprep.subr.mxu0 0.0
        %1543 = vmatpush1.msra.mxu0 0.0
        %1544 = vmatprep.subr.mxu0 0.0
        %1545 = vmatpush1.msra.mxu0 0.0
        %1546 = vmatprep.subr.mxu0 0.0
        %1547 = vmatpush1.msra.mxu0 %v1292
        %1548 = vmatprep.subr.mxu0 0.0
        %1549 = vmatpush2.msra.mxu0 0.0
        %1550 = vmatprep.subr.mxu0 0.0
        %1551 = vmatpush2.msra.mxu0 0.0
        %1552 = vmatprep.subr.mxu0 0.0
        %1553 = vmatpush2.msra.mxu0 0.0
        %1554 = vmatprep.subr.mxu0 0.0
        %1555 = vmatpush2.msra.mxu0 0.0
        %1556 = vmatprep.subr.mxu0 0.0
        %1557 = vmatpush2.msra.mxu0 0.0
        %1558 = vmatprep.subr.mxu0 0.0
        %1559 = vmatpush2.msra.mxu0 0.0
        %1560 = vmatprep.subr.mxu0 0.0
        %1561 = vmatpush2.msra.mxu0 0.0
        %1562 = vmatprep.subr.mxu0 0.0
        %1563 = vmatpush2.msra.mxu0 0.0
        %1564 = vmatprep.subr.mxu0 0.0
        %1565 = vmatpush2.msra.mxu0 0.0
        %1566 = vmatprep.subr.mxu0 0.0
        %1567 = vmatpush2.msra.mxu0 0.0
        %1568 = vmatprep.subr.mxu0 0.0
        %1569 = vmatpush2.msra.mxu0 0.0
        %1570 = vmatprep.subr.mxu0 0.0
        %1571 = vmatpush2.msra.mxu0 0.0
        %1572 = vmatprep.subr.mxu0 0.0
        %1573 = vmatpush2.msra.mxu0 0.0
        %1574 = vmatprep.subr.mxu0 0.0
        %1575 = vmatpush2.msra.mxu0 0.0
        %1576 = vmatprep.subr.mxu0 0.0
        %1577 = vmatpush2.msra.mxu0 0.0
        %1578 = vmatprep.subr.mxu0 0.0
        %1579 = vmatpush2.msra.mxu0 0.0
        %1580 = vmatprep.mubr.f32.mxu0 0.0
        %1581 = vmatmul.mubr.f32.gmra.mxu0 %v1514
        %v1582 = vpop.f32.mrf.mxu0
        %v1583 = vadd.f32 0.0, %v1582
        %v1584 = vpop.f32.mrf.mxu0
        %1585 = vdwg.mxu0
        %v1586 = vadd.f32 %v1512, %v1583
        %v1587 = vadd.f32 %v274, %v1586
        %v1588 = vld [vmem:[%s3] sm:$0xff]
        %v1589 = vld [vmem:[%s3 + $0x8] sm:$0xff]
        %v1590 = vld [vmem:[%s3 + $0x10] sm:$0xff]
        %v1591 = vld [vmem:[%s3 + $0x18] sm:$0xff]
        %v1592 = vld [vmem:[%s4] sm:$0x1]
        %v1594 = vlaneseq
        %v1595 = vshrl.u32 %v1594, 7
        %v1596 = vsub.s32 0, %v1595
        %v1597 = vrot.slane %v1592, %v1596
        %v1600 = vsel %vm291, %v1587, 0
        %1602 = vmatprep.subr.mxu0 0.0
        %1603 = vmatpush1.msra.mxu0 0.0
        %1604 = vmatprep.subr.mxu0 0.0
        %1605 = vmatpush1.msra.mxu0 0.0
        %1606 = vmatprep.subr.mxu0 0.0
        %1607 = vmatpush1.msra.mxu0 0.0
        %1608 = vmatprep.subr.mxu0 0.0
        %1609 = vmatpush1.msra.mxu0 0.0
        %1610 = vmatprep.subr.mxu0 0.0
        %1611 = vmatpush1.msra.mxu0 0.0
        %1612 = vmatprep.subr.mxu0 0.0
        %1613 = vmatpush1.msra.mxu0 0.0
        %1614 = vmatprep.subr.mxu0 0.0
        %1615 = vmatpush1.msra.mxu0 0.0
        %1616 = vmatprep.subr.mxu0 0.0
        %1617 = vmatpush1.msra.mxu0 0.0
        %1618 = vmatprep.subr.mxu0 0.0
        %1619 = vmatpush1.msra.mxu0 0.0
        %1620 = vmatprep.subr.mxu0 0.0
        %1621 = vmatpush1.msra.mxu0 0.0
        %1622 = vmatprep.subr.mxu0 0.0
        %1623 = vmatpush1.msra.mxu0 0.0
        %1624 = vmatprep.subr.mxu0 0.0
        %1625 = vmatpush1.msra.mxu0 0.0
        %1626 = vmatprep.subr.mxu0 0.0
        %1627 = vmatpush1.msra.mxu0 %v1591
        %1628 = vmatprep.subr.mxu0 0.0
        %1629 = vmatpush1.msra.mxu0 %v1590
        %1630 = vmatprep.subr.mxu0 0.0
        %1631 = vmatpush1.msra.mxu0 %v1589
        %1632 = vmatprep.subr.mxu0 0.0
        %1633 = vmatpush1.msra.mxu0 %v1588
        %1634 = vmatprep.subr.mxu0 0.0
        %1635 = vmatpush2.msra.mxu0 0.0
        %1636 = vmatprep.subr.mxu0 0.0
        %1637 = vmatpush2.msra.mxu0 0.0
        %1638 = vmatprep.subr.mxu0 0.0
        %1639 = vmatpush2.msra.mxu0 0.0
        %1640 = vmatprep.subr.mxu0 0.0
        %1641 = vmatpush2.msra.mxu0 0.0
        %1642 = vmatprep.subr.mxu0 0.0
        %1643 = vmatpush2.msra.mxu0 0.0
        %1644 = vmatprep.subr.mxu0 0.0
        %1645 = vmatpush2.msra.mxu0 0.0
        %1646 = vmatprep.subr.mxu0 0.0
        %1647 = vmatpush2.msra.mxu0 0.0
        %1648 = vmatprep.subr.mxu0 0.0
        %1649 = vmatpush2.msra.mxu0 0.0
        %1650 = vmatprep.subr.mxu0 0.0
        %1651 = vmatpush2.msra.mxu0 0.0
        %1652 = vmatprep.subr.mxu0 0.0
        %1653 = vmatpush2.msra.mxu0 0.0
        %1654 = vmatprep.subr.mxu0 0.0
        %1655 = vmatpush2.msra.mxu0 0.0
        %1656 = vmatprep.subr.mxu0 0.0
        %1657 = vmatpush2.msra.mxu0 0.0
        %1658 = vmatprep.subr.mxu0 0.0
        %1659 = vmatpush2.msra.mxu0 0.0
        %1660 = vmatprep.subr.mxu0 0.0
        %1661 = vmatpush2.msra.mxu0 0.0
        %1662 = vmatprep.subr.mxu0 0.0
        %1663 = vmatpush2.msra.mxu0 0.0
        %1664 = vmatprep.subr.mxu0 0.0
        %1665 = vmatpush2.msra.mxu0 0.0
        %1666 = vmatprep.mubr.f32.mxu0 0.0
        %1667 = vmatmul.mubr.f32.gmra.mxu0 %v1600
        %v1668 = vpop.f32.mrf.mxu0
        %v1669 = vadd.f32 %v1597, %v1668
        %v1670 = vpop.f32.mrf.mxu0
        %1671 = vdwg.mxu0
        %v1672 = vmax.f32 %v1669, 0.0
        %v1673 = vld [vmem:[%s5] sm:$0xff]
        %v1674 = vld [vmem:[%s5 + $0x8] sm:$0xff]
        %v1675 = vld [vmem:[%s5 + $0x10] sm:$0xff]
        %v1676 = vld [vmem:[%s5 + $0x18] sm:$0xff]
        %v1677 = vld [vmem:[%s5 + $0x20] sm:$0xff]
        %v1678 = vld [vmem:[%s5 + $0x28] sm:$0xff]
        %v1679 = vld [vmem:[%s5 + $0x30] sm:$0xff]
        %v1680 = vld [vmem:[%s5 + $0x38] sm:$0xff]
        %v1681 = vld [vmem:[%s5 + $0x40] sm:$0xff]
        %v1682 = vld [vmem:[%s5 + $0x48] sm:$0xff]
        %v1683 = vld [vmem:[%s5 + $0x50] sm:$0xff]
        %v1684 = vld [vmem:[%s5 + $0x58] sm:$0xff]
        %v1685 = vld [vmem:[%s5 + $0x60] sm:$0xff]
        %v1686 = vld [vmem:[%s5 + $0x68] sm:$0xff]
        %v1687 = vld [vmem:[%s5 + $0x70] sm:$0xff]
        %v1688 = vld [vmem:[%s5 + $0x78] sm:$0xff]
        %v1689 = vld [vmem:[%s6] sm:$0x1]
        %v1691 = vlaneseq
        %v1692 = vshrl.u32 %v1691, 7
        %v1693 = vsub.s32 0, %v1692
        %v1694 = vrot.slane %v1689, %v1693
        %1696 = vmatprep.subr.mxu0 0.0
        %1697 = vmatpush1.msra.mxu0 %v1688
        %1698 = vmatprep.subr.mxu0 0.0
        %1699 = vmatpush1.msra.mxu0 %v1687
        %1700 = vmatprep.subr.mxu0 0.0
        %1701 = vmatpush1.msra.mxu0 %v1686
        %1702 = vmatprep.subr.mxu0 0.0
        %1703 = vmatpush1.msra.mxu0 %v1685
        %1704 = vmatprep.subr.mxu0 0.0
        %1705 = vmatpush1.msra.mxu0 %v1684
        %1706 = vmatprep.subr.mxu0 0.0
        %1707 = vmatpush1.msra.mxu0 %v1683
        %1708 = vmatprep.subr.mxu0 0.0
        %1709 = vmatpush1.msra.mxu0 %v1682
        %1710 = vmatprep.subr.mxu0 0.0
        %1711 = vmatpush1.msra.mxu0 %v1681
        %1712 = vmatprep.subr.mxu0 0.0
        %1713 = vmatpush1.msra.mxu0 %v1680
        %1714 = vmatprep.subr.mxu0 0.0
        %1715 = vmatpush1.msra.mxu0 %v1679
        %1716 = vmatprep.subr.mxu0 0.0
        %1717 = vmatpush1.msra.mxu0 %v1678
        %1718 = vmatprep.subr.mxu0 0.0
        %1719 = vmatpush1.msra.mxu0 %v1677
        %1720 = vmatprep.subr.mxu0 0.0
        %1721 = vmatpush1.msra.mxu0 %v1676
        %1722 = vmatprep.subr.mxu0 0.0
        %1723 = vmatpush1.msra.mxu0 %v1675
        %1724 = vmatprep.subr.mxu0 0.0
        %1725 = vmatpush1.msra.mxu0 %v1674
        %1726 = vmatprep.subr.mxu0 0.0
        %1727 = vmatpush1.msra.mxu0 %v1673
        %1728 = vmatprep.subr.mxu0 0.0
        %1729 = vmatpush2.msra.mxu0 0.0
        %1730 = vmatprep.subr.mxu0 0.0
        %1731 = vmatpush2.msra.mxu0 0.0
        %1732 = vmatprep.subr.mxu0 0.0
        %1733 = vmatpush2.msra.mxu0 0.0
        %1734 = vmatprep.subr.mxu0 0.0
        %1735 = vmatpush2.msra.mxu0 0.0
        %1736 = vmatprep.subr.mxu0 0.0
        %1737 = vmatpush2.msra.mxu0 0.0
        %1738 = vmatprep.subr.mxu0 0.0
        %1739 = vmatpush2.msra.mxu0 0.0
        %1740 = vmatprep.subr.mxu0 0.0
        %1741 = vmatpush2.msra.mxu0 0.0
        %1742 = vmatprep.subr.mxu0 0.0
        %1743 = vmatpush2.msra.mxu0 0.0
        %1744 = vmatprep.subr.mxu0 0.0
        %1745 = vmatpush2.msra.mxu0 0.0
        %1746 = vmatprep.subr.mxu0 0.0
        %1747 = vmatpush2.msra.mxu0 0.0
        %1748 = vmatprep.subr.mxu0 0.0
        %1749 = vmatpush2.msra.mxu0 0.0
        %1750 = vmatprep.subr.mxu0 0.0
        %1751 = vmatpush2.msra.mxu0 0.0
        %1752 = vmatprep.subr.mxu0 0.0
        %1753 = vmatpush2.msra.mxu0 0.0
        %1754 = vmatprep.subr.mxu0 0.0
        %1755 = vmatpush2.msra.mxu0 0.0
        %1756 = vmatprep.subr.mxu0 0.0
        %1757 = vmatpush2.msra.mxu0 0.0
        %1758 = vmatprep.subr.mxu0 0.0
        %1759 = vmatpush2.msra.mxu0 0.0
        %1760 = vmatprep.mubr.f32.mxu0 0.0
        %1761 = vmatmul.mubr.f32.gmra.mxu0 %v1672
        %v1762 = vpop.f32.mrf.mxu0
        %v1763 = vadd.f32 %v1694, %v1762
        %v1764 = vpop.f32.mrf.mxu0
        %1765 = vdwg.mxu0
        %v1766 = vadd.f32 %v1587, %v1763
        %1767 = vst.msk [vmem:[%s269] sm:$0xff] %vm291, %v1766
        %s1768 = sand.u32 %s181, 1
        %s1769 = scalar_lea.sflag [#allocation3], %s1768
        %s1770 = sand.u32 %s181, 1
        %s1771 = smul.addr %s1770, 8
        %s1772 = scalar_lea.vmem [#allocation2], %s1771
        // Predicated region
        $region49: #{tpu_custom_call.1} parent=47 // pred_check
          %p1773 = pneg %p191
        $region50: #{tpu_custom_call.1} parent=47 // pred_check_branch
          %1775 = sbr.rel (%p1773) target = $region52
        $region51: #{tpu_custom_call.1} parent=47 // pred_region
          %s1777 = ssub.s32 128, 128
          %1778 = vsyncadd %s1769, %s1777
          %s1779 = smul.addr %s21, 128
          %s1780 = scalar_lea.hbm %s7, %s1779
          %s1782 = sshll.u32 %s1772, 4
          %s1783 = int_to_ptr.vmem [resolvable:$true] %s1782
          %1785 = dma.vmem_to_hbm [thread:$0]  %s1783, 128, %s1780, %s1769
        $region52: #{tpu_custom_call.1} parent=47 // pred_fallthru
          _
      $region48: #{tpu_custom_call.1} parent=5 // pred_fallthru
        _
      %p1786 = scmp.le.s32.totalorder 2, %s16
      // Predicated region
      $region53: #{tpu_custom_call.1} parent=5 // pred_check
        %p1787 = pneg %p1786
      $region54: #{tpu_custom_call.1} parent=5 // pred_check_branch
        %1789 = sbr.rel (%p1787) target = $region56
      $region55: #{tpu_custom_call.1} parent=5 // pred_region
        %s1790 = ssub.s32 %s16, 2
        // Predicated region
        $region57: #{tpu_custom_call.1} parent=55 // pred_check
          %p1791 = pneg %p197
        $region58: #{tpu_custom_call.1} parent=55 // pred_check_branch
          %1793 = sbr.rel (%p1791) target = $region60
        $region59: #{tpu_custom_call.1} parent=55 // pred_region
          %s1794 = sand.u32 %s182, 1
          %s1795 = scalar_lea.sflag [#allocation3], %s1794
          %s1796 = sand.u32 %s182, 1
          %s1797 = smul.addr %s1796, 8
          %s1798 = scalar_lea.vmem [#allocation2], %s1797
          %1799 = dma.done %s1795, 128
        $region60: #{tpu_custom_call.1} parent=55 // pred_fallthru
          _
      $region56: #{tpu_custom_call.1} parent=5 // pred_fallthru
        _
    $region6: #{tpu_custom_call.1} parent=1 // loop_footer
      %s20 = sadd.s32 1, %s16
    $region7: #{tpu_custom_call.1} parent=1 // loop_footer_branch
      %15 = sbr.rel target = $region3
    $region8: #{tpu_custom_call.1} parent=1 // loop_exit
      _
    %1800 = vsyncpa [#allocation3], 1
    %s1801 = scalar_lea.sflag [#allocation3], 1
    %1802 = vsyncpa %s1801, 1

</llo_original>
